<compile_context>
chip_gen: v5e
topology: v5e:2x2
jax: 0.10.0
libtpu: 0.0.40
codegen_flags: <defaults>
</compile_context>

<pallas_src>
import math

import jax
import jax.numpy as jnp
from jax import lax
from jax.experimental import pallas as pl
from jax.experimental.pallas import tpu as pltpu


# ----------------------------------------------------------------------------
# Static layout constants.
# ----------------------------------------------------------------------------
C = 20              # conv channels
WA = 20             # board row stride (20x20 board, flat index p = 20*i + j)
NLANES = 512        # padded flat spatial extent (4 full 128-lane tiles)
SLAB_COLS = 128     # weight-slab lane width
CONV_GS = 24        # 8-aligned row spacing between per-conv weight groups
BIAS_R = 4 * CONV_GS        # 96: row base of the bias block
SLAB_ROWS = BIAS_R + CONV_GS  # 120 rows total (96 weight rows + 24 bias rows)

# Flat lane positions of the final 3x3 pooled map (strided layout: the 9x9
# pool-1 output sits at 40*i + 2*j, the 3x3 pool-2 output at 80*i + 4*j).
HEAD_POS = tuple(80 * (q // 3) + 4 * (q % 3) for q in range(9))


# ----------------------------------------------------------------------------
# Pallas kernel: the whole forward pass for ONE board (one grid step).
# ----------------------------------------------------------------------------
def _snake_cnn_kernel(x_ref, p_ref, w3_ref, o_ref):
    f32 = jnp.float32

    def lshift(v, off):
        # result[:, p] = v[:, (p + off) % NLANES].  Circular wrap only puts
        # (finite) garbage at high lane positions that are never read for any
        # valid output position, and the head masks everything else with
        # exact zeros.
        if off == 0:
            return v
        return pltpu.roll(v, shift=NLANES - off, axis=1)

    def mm(w, a):
        # w: (cout, cin), a: (cin, NLANES) -> (cout, NLANES).
        if w.shape[1] == 1:          # cin == 1: outer product on the VPU
            return w * a
        return jnp.dot(w, a, preferred_element_type=f32)

    def conv2x2_relu(a, cin, cout, idx, cs, rs):
        # 2x2 / stride-1 'valid' conv + ReLU on the flat lane layout whose
        # column stride is `cs` and row stride is `rs`.
        # out[p] = relu(w00.a[p] + w01.a[p+cs] + w10.a[p+rs] + w11.a[p+rs+cs] + b)
        base = CONV_GS * idx
        a1 = lshift(a, cs)
        w = lambda t: p_ref[base:base + cout, 32 * t:32 * t + cin]
        c = mm(w(0), a) + mm(w(1), a1)          # taps (0,0), (0,1)
        d = mm(w(2), a) + mm(w(3), a1)          # taps (1,0), (1,1)
        b = p_ref[BIAS_R:BIAS_R + cout, idx:idx + 1]   # (cout, 1), lane-broadcast
        return jnp.maximum(c + lshift(d, rs) + b, 0.0)

    def maxpool2x2(a, cs, rs):
        # out[p] = max(a[p], a[p+cs], a[p+rs], a[p+rs+cs]); the stride-2
        # subsampling is free -- downstream stages simply read the even
        # positions of the strided layout.
        m = jnp.maximum(a, lshift(a, cs))
        return jnp.maximum(m, lshift(m, rs))

    x = x_ref[0]                                        # (1, 512) board row
    # --- conv_b1 -------------------------------------------------------------
    h = conv2x2_relu(x, 1, C, 0, 1, WA)                 # 19x19 valid @ 20i+j
    h = conv2x2_relu(h, C, C, 1, 1, WA)                 # 18x18 valid
    h = maxpool2x2(h, 1, WA)                            # 9x9 pooled @ 40i+2j
    # --- conv_b2 (strided layout: col stride 2, row stride 40) ---------------
    h = conv2x2_relu(h, C, C, 2, 2, 2 * WA)             # 8x8 valid @ 40i+2j
    h = conv2x2_relu(h, C, 1, 3, 2, 2 * WA)             # channel 0 only: 7x7
    h = maxpool2x2(h, 2, 2 * WA)                        # 3x3 pooled @ 80i+4j
    # --- head: Flatten + ReLU + Linear(9,9) + Linear(9,3), row 0 only --------
    r = jnp.maximum(h, 0.0)                             # module's post-Flatten ReLU
    z = w3_ref[0:3, :] * r                              # folded head, scattered over lanes
    logits = jnp.sum(z, axis=1, keepdims=True)          # (3, 1)
    logits = logits + p_ref[BIAS_R:BIAS_R + 3, 4:5]     # folded head bias
    o_ref[...] = jnp.zeros((1, 8, 128), f32)
    o_ref[0, 0:3, 0:1] = logits


# ----------------------------------------------------------------------------
# Host-side parameter packing.
# ----------------------------------------------------------------------------
def pack_params(p):
    """Pack conv weights/biases + folded head bias into one (120, 128) slab.

    Conv idx c occupies rows [24c, 24c+20); tap t=(di,dj) lives in lane group
    [32t, 32t+cin).  Bias block: rows [96, 116) col c = conv-c bias; rows
    [96, 99) col 4 = folded head bias.
    """
    slab = jnp.zeros((SLAB_ROWS, SLAB_COLS), jnp.float32)
    convs = [("w1a", "b1a"), ("w1b", "b1b"), ("w2a", "b2a"), ("w2b", "b2b")]
    for ci, (wn, bn) in enumerate(convs):
        w = jnp.asarray(p[wn], jnp.float32)             # (20, cin, 2, 2)
        cin = int(w.shape[1])
        for t in range(4):
            di, dj = t // 2, t % 2
            slab = slab.at[CONV_GS * ci:CONV_GS * ci + C,
                           32 * t:32 * t + cin].set(w[:, :, di, dj])
        b = jnp.asarray(p[bn], jnp.float32)[:, None]    # (20, 1)
        slab = slab.at[BIAS_R:BIAS_R + C, ci:ci + 1].set(b)
    # Folded head bias: bl1 @ Wl2.T + bl2.
    bc = (jnp.asarray(p["bl1"], jnp.float32) @ jnp.asarray(p["wl2"], jnp.float32).T
          + jnp.asarray(p["bl2"], jnp.float32))
    slab = slab.at[BIAS_R:BIAS_R + 3, 4:5].set(bc[:, None])
    return slab


def pack_head(p):
    """Folded Linear(9,9)+Linear(9,3) weights scattered onto the 9 pooled
    lane positions of the strided layout -> (8, 512) constant (rows 3..7 = 0)."""
    a = (jnp.asarray(p["wl1"], jnp.float32).T
         @ jnp.asarray(p["wl2"], jnp.float32).T)        # (9, 3)
    w3 = jnp.zeros((8, NLANES), jnp.float32)
    for q, pos in enumerate(HEAD_POS):
        w3 = w3.at[0:3, pos].set(a[q, :])
    return w3


# ----------------------------------------------------------------------------
# Wrappers.
# ----------------------------------------------------------------------------
def model_cnn_forward_batch(boards, slab, w3):
    """boards: (B, 1, 20, 20).  Each board follows the module's unbatched
    forward (conv_b1 -> conv_b2 -> out -> x[0]); returns (B, 3)."""
    b_dim = boards.shape[0]
    xb = boards.astype(jnp.float32).reshape(b_dim, 1, WA * WA)
    xb = jnp.pad(xb, ((0, 0), (0, 0), (0, NLANES - WA * WA)))
    y = pl.pallas_call(
        _snake_cnn_kernel,
        out_shape=jax.ShapeDtypeStruct((b_dim, 8, 128), jnp.float32),
        grid=(b_dim,),
        in_specs=[
            pl.BlockSpec((1, 1, NLANES), lambda b: (b, 0, 0)),        # board / step
            pl.BlockSpec((SLAB_ROWS, SLAB_COLS), lambda b: (0, 0)),   # resident slab
            pl.BlockSpec((8, NLANES), lambda b: (0, 0)),              # resident head const
        ],
        out_specs=pl.BlockSpec((1, 8, 128), lambda b: (b, 0, 0)),
        compiler_params=pltpu.CompilerParams(
            dimension_semantics=("parallel",)),
    )(xb, slab, w3)
    return y[:, 0:3, 0]                                  # (B, 3)


def model_cnn_forward(board, slab, w3):
    """Module-exact unbatched forward: (1, 20, 20) -> (3,)."""
    return model_cnn_forward_batch(board[None], slab, w3)[0]


# ----------------------------------------------------------------------------
# Deterministic parameter init (synthetic, PyTorch-default-style uniform).
# ----------------------------------------------------------------------------
def init_params(key):
    ks = jax.random.split(key, 6)

    def conv_init(k, cout, cin):
        bound = 1.0 / math.sqrt(cin * 2 * 2)
        kw, kb = jax.random.split(k)
        w = jax.random.uniform(kw, (cout, cin, 2, 2), jnp.float32, -bound, bound)
        b = jax.random.uniform(kb, (cout,), jnp.float32, -bound, bound)
        return w, b

    def lin_init(k, out_f, in_f):
        bound = 1.0 / math.sqrt(in_f)
        kw, kb = jax.random.split(k)
        w = jax.random.uniform(kw, (out_f, in_f), jnp.float32, -bound, bound)
        b = jax.random.uniform(kb, (out_f,), jnp.float32, -bound, bound)
        return w, b

    p = {}
    p["w1a"], p["b1a"] = conv_init(ks[0], 20, 1)
    p["w1b"], p["b1b"] = conv_init(ks[1], 20, 20)
    p["w2a"], p["b2a"] = conv_init(ks[2], 20, 20)
    p["w2b"], p["b2b"] = conv_init(ks[3], 20, 20)
    p["wl1"], p["bl1"] = lin_init(ks[4], 9, 9)
    p["wl2"], p["bl2"] = lin_init(ks[5], 3, 9)
    return p
    # TODO(synk): self.stats / self.log step bookkeeping has no numeric effect; skipped.


# ----------------------------------------------------------------------------
# Pure-JAX reference (numerical sanity check only).
# ----------------------------------------------------------------------------
def ref_forward(x_chw, p):
    x = x_chw[None].astype(jnp.float32)                  # (1, 1, 20, 20)
    dn = lax.conv_dimension_numbers(x.shape, p["w1a"].shape,
                                    ("NCHW", "OIHW", "NCHW"))

    def conv(v, w, b):
        y = lax.conv_general_dilated(v, w, (1, 1), "VALID", dimension_numbers=dn)
        return y + b[None, :, None, None]

    def pool(v):
        return lax.reduce_window(v, -jnp.inf, lax.max,
                                 (1, 1, 2, 2), (1, 1, 2, 2), "VALID")

    y = jax.nn.relu(conv(x, p["w1a"], p["b1a"]))
    y = jax.nn.relu(conv(y, p["w1b"], p["b1b"]))
    y = pool(y)
    y = jax.nn.relu(conv(y, p["w2a"], p["b2a"]))
    y = jax.nn.relu(conv(y, p["w2b"], p["b2b"]))
    y = pool(y)                                          # (1, 20, 3, 3)
    a = y[0].reshape(20, 9)                              # Flatten(start_dim=1)
    a = jax.nn.relu(a)
    a = a @ p["wl1"].T + p["bl1"]
    a = a @ p["wl2"].T + p["bl2"]                        # (20, 3)
    return a[0]                                          # (3,)


if __name__ == "__main__":
    key = jax.random.PRNGKey(0)
    pkey, xkey = jax.random.split(key)
    params = init_params(pkey)
    slab = pack_params(params)
    w3 = pack_head(params)

    # Batch of snake boards (each board (1, 20, 20), the module's only valid
    # input shape); the kernel evaluates them independently over a parallel grid.
    B = 8
    boards = jax.random.uniform(xkey, (B, 1, 20, 20), jnp.float32)

    fwd = jax.jit(model_cnn_forward_batch)
    out = jax.block_until_ready(fwd(boards, slab, w3))
    assert out.shape == (B, 3)

    # Module-exact unbatched path.
    single = jax.block_until_ready(jax.jit(model_cnn_forward)(boards[0], slab, w3))
    assert single.shape == (3,)

    # Reference check.
    ref = jnp.stack([ref_forward(boards[i], params) for i in range(B)])
    err = float(jnp.max(jnp.abs(out - ref)))
    assert err < 1e-3, f"mismatch vs reference: {err}"
    err1 = float(jnp.max(jnp.abs(single - ref[0])))
    assert err1 < 1e-3, f"single-board mismatch vs reference: {err1}"

    print("KERNEL_OK")
</pallas_src>

<mosaic_0001>
module attributes {stable_mosaic.version = 11 : i64} {
  func.func @_snake_cnn_kernel(%arg0: i32, %arg1: memref<1x1x512xf32, #tpu.memory_space<vmem>>, %arg2: memref<120x128xf32, #tpu.memory_space<vmem>>, %arg3: memref<8x512xf32, #tpu.memory_space<vmem>>, %arg4: memref<1x8x128xf32, #tpu.memory_space<vmem>>) attributes {dimension_semantics = [#tpu.dimension_semantics<parallel>], iteration_bounds = array<i64: 8>, scalar_prefetch = 0 : i64, scratch_operands = 0 : i64, tpu.core_type = #tpu.core_type<tc>, window_params = [{transform_indices = @transform_0, window_bounds = array<i64: 1, 1, 512>}, {pipeline_mode = #tpu.pipeline_mode<synchronous>, transform_indices = @transform_1, window_bounds = array<i64: 120, 128>}, {pipeline_mode = #tpu.pipeline_mode<synchronous>, transform_indices = @transform_2, window_bounds = array<i64: 8, 512>}, {transform_indices = @transform_3, window_bounds = array<i64: 1, 8, 128>}]} {
    %c0 = arith.constant 0 : index
    %c0_0 = arith.constant 0 : index
    %c0_1 = arith.constant 0 : index
    %0 = vector.load %arg1[%c0, %c0_0, %c0_1] : memref<1x1x512xf32, #tpu.memory_space<vmem>>, vector<1x1x512xf32>
    %1 = vector.shape_cast %0 : vector<1x1x512xf32> to vector<1x512xf32>
    %c511_i32 = arith.constant 511 : i32
    %2 = tpu.dynamic_rotate %1 by %c511_i32 dim 1 : vector<1x512xf32>, i32 -> vector<1x512xf32>
    %c0_2 = arith.constant 0 : index
    %c0_3 = arith.constant 0 : index
    %3 = vector.load %arg2[%c0_2, %c0_3] : memref<120x128xf32, #tpu.memory_space<vmem>>, vector<20x1xf32>
    %4 = vector.broadcast %3 : vector<20x1xf32> to vector<20x512xf32>
    %5 = vector.broadcast %1 : vector<1x512xf32> to vector<20x512xf32>
    %6 = arith.mulf %4, %5 : vector<20x512xf32>
    %c0_4 = arith.constant 0 : index
    %c32 = arith.constant 32 : index
    %7 = vector.load %arg2[%c0_4, %c32] : memref<120x128xf32, #tpu.memory_space<vmem>>, vector<20x1xf32>
    %8 = vector.broadcast %7 : vector<20x1xf32> to vector<20x512xf32>
    %9 = vector.broadcast %2 : vector<1x512xf32> to vector<20x512xf32>
    %10 = arith.mulf %8, %9 : vector<20x512xf32>
    %11 = arith.addf %6, %10 : vector<20x512xf32>
    %c0_5 = arith.constant 0 : index
    %c64 = arith.constant 64 : index
    %12 = vector.load %arg2[%c0_5, %c64] : memref<120x128xf32, #tpu.memory_space<vmem>>, vector<20x1xf32>
    %13 = vector.broadcast %12 : vector<20x1xf32> to vector<20x512xf32>
    %14 = vector.broadcast %1 : vector<1x512xf32> to vector<20x512xf32>
    %15 = arith.mulf %13, %14 : vector<20x512xf32>
    %c0_6 = arith.constant 0 : index
    %c96 = arith.constant 96 : index
    %16 = vector.load %arg2[%c0_6, %c96] : memref<120x128xf32, #tpu.memory_space<vmem>>, vector<20x1xf32>
    %17 = vector.broadcast %16 : vector<20x1xf32> to vector<20x512xf32>
    %18 = vector.broadcast %2 : vector<1x512xf32> to vector<20x512xf32>
    %19 = arith.mulf %17, %18 : vector<20x512xf32>
    %20 = arith.addf %15, %19 : vector<20x512xf32>
    %c96_7 = arith.constant 96 : index
    %c0_8 = arith.constant 0 : index
    %21 = vector.load %arg2[%c96_7, %c0_8] : memref<120x128xf32, #tpu.memory_space<vmem>>, vector<20x1xf32>
    %c492_i32 = arith.constant 492 : i32
    %22 = tpu.dynamic_rotate %20 by %c492_i32 dim 1 : vector<20x512xf32>, i32 -> vector<20x512xf32>
    %23 = arith.addf %11, %22 : vector<20x512xf32>
    %24 = vector.broadcast %21 : vector<20x1xf32> to vector<20x512xf32>
    %25 = arith.addf %23, %24 : vector<20x512xf32>
    %cst = arith.constant 0.000000e+00 : f32
    %26 = vector.broadcast %cst : f32 to vector<20x512xf32>
    %27 = arith.maximumf %25, %26 : vector<20x512xf32>
    %c511_i32_9 = arith.constant 511 : i32
    %28 = tpu.dynamic_rotate %27 by %c511_i32_9 dim 1 : vector<20x512xf32>, i32 -> vector<20x512xf32>
    %c24 = arith.constant 24 : index
    %c0_10 = arith.constant 0 : index
    %29 = vector.load %arg2[%c24, %c0_10] : memref<120x128xf32, #tpu.memory_space<vmem>>, vector<20x20xf32>
    %cst_11 = arith.constant dense<0.000000e+00> : vector<20x512xf32>
    %30 = tpu.matmul %29, %27, %cst_11 {dimension_numbers = #tpu.dot_dimension_numbers<[1], [0], [0], [1], [0, 0, 1, 1], [], []>} : vector<20x20xf32>, vector<20x512xf32>, vector<20x512xf32> -> vector<20x512xf32>
    %c24_12 = arith.constant 24 : index
    %c32_13 = arith.constant 32 : index
    %31 = vector.load %arg2[%c24_12, %c32_13] : memref<120x128xf32, #tpu.memory_space<vmem>>, vector<20x20xf32>
    %cst_14 = arith.constant dense<0.000000e+00> : vector<20x512xf32>
    %32 = tpu.matmul %31, %28, %cst_14 {dimension_numbers = #tpu.dot_dimension_numbers<[1], [0], [0], [1], [0, 0, 1, 1], [], []>} : vector<20x20xf32>, vector<20x512xf32>, vector<20x512xf32> -> vector<20x512xf32>
    %33 = arith.addf %30, %32 : vector<20x512xf32>
    %c24_15 = arith.constant 24 : index
    %c64_16 = arith.constant 64 : index
    %34 = vector.load %arg2[%c24_15, %c64_16] : memref<120x128xf32, #tpu.memory_space<vmem>>, vector<20x20xf32>
    %cst_17 = arith.constant dense<0.000000e+00> : vector<20x512xf32>
    %35 = tpu.matmul %34, %27, %cst_17 {dimension_numbers = #tpu.dot_dimension_numbers<[1], [0], [0], [1], [0, 0, 1, 1], [], []>} : vector<20x20xf32>, vector<20x512xf32>, vector<20x512xf32> -> vector<20x512xf32>
    %c24_18 = arith.constant 24 : index
    %c96_19 = arith.constant 96 : index
    %36 = vector.load %arg2[%c24_18, %c96_19] : memref<120x128xf32, #tpu.memory_space<vmem>>, vector<20x20xf32>
    %cst_20 = arith.constant dense<0.000000e+00> : vector<20x512xf32>
    %37 = tpu.matmul %36, %28, %cst_20 {dimension_numbers = #tpu.dot_dimension_numbers<[1], [0], [0], [1], [0, 0, 1, 1], [], []>} : vector<20x20xf32>, vector<20x512xf32>, vector<20x512xf32> -> vector<20x512xf32>
    %38 = arith.addf %35, %37 : vector<20x512xf32>
    %c96_21 = arith.constant 96 : index
    %c1 = arith.constant 1 : index
    %39 = vector.load %arg2[%c96_21, %c1] : memref<120x128xf32, #tpu.memory_space<vmem>>, vector<20x1xf32>
    %c492_i32_22 = arith.constant 492 : i32
    %40 = tpu.dynamic_rotate %38 by %c492_i32_22 dim 1 : vector<20x512xf32>, i32 -> vector<20x512xf32>
    %41 = arith.addf %33, %40 : vector<20x512xf32>
    %42 = vector.broadcast %39 : vector<20x1xf32> to vector<20x512xf32>
    %43 = arith.addf %41, %42 : vector<20x512xf32>
    %cst_23 = arith.constant 0.000000e+00 : f32
    %44 = vector.broadcast %cst_23 : f32 to vector<20x512xf32>
    %45 = arith.maximumf %43, %44 : vector<20x512xf32>
    %c511_i32_24 = arith.constant 511 : i32
    %46 = tpu.dynamic_rotate %45 by %c511_i32_24 dim 1 : vector<20x512xf32>, i32 -> vector<20x512xf32>
    %47 = arith.maximumf %45, %46 : vector<20x512xf32>
    %c492_i32_25 = arith.constant 492 : i32
    %48 = tpu.dynamic_rotate %47 by %c492_i32_25 dim 1 : vector<20x512xf32>, i32 -> vector<20x512xf32>
    %49 = arith.maximumf %47, %48 : vector<20x512xf32>
    %c510_i32 = arith.constant 510 : i32
    %50 = tpu.dynamic_rotate %49 by %c510_i32 dim 1 : vector<20x512xf32>, i32 -> vector<20x512xf32>
    %c48 = arith.constant 48 : index
    %c0_26 = arith.constant 0 : index
    %51 = vector.load %arg2[%c48, %c0_26] : memref<120x128xf32, #tpu.memory_space<vmem>>, vector<20x20xf32>
    %cst_27 = arith.constant dense<0.000000e+00> : vector<20x512xf32>
    %52 = tpu.matmul %51, %49, %cst_27 {dimension_numbers = #tpu.dot_dimension_numbers<[1], [0], [0], [1], [0, 0, 1, 1], [], []>} : vector<20x20xf32>, vector<20x512xf32>, vector<20x512xf32> -> vector<20x512xf32>
    %c48_28 = arith.constant 48 : index
    %c32_29 = arith.constant 32 : index
    %53 = vector.load %arg2[%c48_28, %c32_29] : memref<120x128xf32, #tpu.memory_space<vmem>>, vector<20x20xf32>
    %cst_30 = arith.constant dense<0.000000e+00> : vector<20x512xf32>
    %54 = tpu.matmul %53, %50, %cst_30 {dimension_numbers = #tpu.dot_dimension_numbers<[1], [0], [0], [1], [0, 0, 1, 1], [], []>} : vector<20x20xf32>, vector<20x512xf32>, vector<20x512xf32> -> vector<20x512xf32>
    %55 = arith.addf %52, %54 : vector<20x512xf32>
    %c48_31 = arith.constant 48 : index
    %c64_32 = arith.constant 64 : index
    %56 = vector.load %arg2[%c48_31, %c64_32] : memref<120x128xf32, #tpu.memory_space<vmem>>, vector<20x20xf32>
    %cst_33 = arith.constant dense<0.000000e+00> : vector<20x512xf32>
    %57 = tpu.matmul %56, %49, %cst_33 {dimension_numbers = #tpu.dot_dimension_numbers<[1], [0], [0], [1], [0, 0, 1, 1], [], []>} : vector<20x20xf32>, vector<20x512xf32>, vector<20x512xf32> -> vector<20x512xf32>
    %c48_34 = arith.constant 48 : index
    %c96_35 = arith.constant 96 : index
    %58 = vector.load %arg2[%c48_34, %c96_35] : memref<120x128xf32, #tpu.memory_space<vmem>>, vector<20x20xf32>
    %cst_36 = arith.constant dense<0.000000e+00> : vector<20x512xf32>
    %59 = tpu.matmul %58, %50, %cst_36 {dimension_numbers = #tpu.dot_dimension_numbers<[1], [0], [0], [1], [0, 0, 1, 1], [], []>} : vector<20x20xf32>, vector<20x512xf32>, vector<20x512xf32> -> vector<20x512xf32>
    %60 = arith.addf %57, %59 : vector<20x512xf32>
    %c96_37 = arith.constant 96 : index
    %c2 = arith.constant 2 : index
    %61 = vector.load %arg2[%c96_37, %c2] : memref<120x128xf32, #tpu.memory_space<vmem>>, vector<20x1xf32>
    %c472_i32 = arith.constant 472 : i32
    %62 = tpu.dynamic_rotate %60 by %c472_i32 dim 1 : vector<20x512xf32>, i32 -> vector<20x512xf32>
    %63 = arith.addf %55, %62 : vector<20x512xf32>
    %64 = vector.broadcast %61 : vector<20x1xf32> to vector<20x512xf32>
    %65 = arith.addf %63, %64 : vector<20x512xf32>
    %cst_38 = arith.constant 0.000000e+00 : f32
    %66 = vector.broadcast %cst_38 : f32 to vector<20x512xf32>
    %67 = arith.maximumf %65, %66 : vector<20x512xf32>
    %c510_i32_39 = arith.constant 510 : i32
    %68 = tpu.dynamic_rotate %67 by %c510_i32_39 dim 1 : vector<20x512xf32>, i32 -> vector<20x512xf32>
    %c72 = arith.constant 72 : index
    %c0_40 = arith.constant 0 : index
    %69 = vector.load %arg2[%c72, %c0_40] : memref<120x128xf32, #tpu.memory_space<vmem>>, vector<1x20xf32>
    %cst_41 = arith.constant dense<0.000000e+00> : vector<1x512xf32>
    %70 = tpu.matmul %69, %67, %cst_41 {dimension_numbers = #tpu.dot_dimension_numbers<[1], [0], [0], [1], [0, 0, 1, 1], [], []>} : vector<1x20xf32>, vector<20x512xf32>, vector<1x512xf32> -> vector<1x512xf32>
    %c72_42 = arith.constant 72 : index
    %c32_43 = arith.constant 32 : index
    %71 = vector.load %arg2[%c72_42, %c32_43] : memref<120x128xf32, #tpu.memory_space<vmem>>, vector<1x20xf32>
    %cst_44 = arith.constant dense<0.000000e+00> : vector<1x512xf32>
    %72 = tpu.matmul %71, %68, %cst_44 {dimension_numbers = #tpu.dot_dimension_numbers<[1], [0], [0], [1], [0, 0, 1, 1], [], []>} : vector<1x20xf32>, vector<20x512xf32>, vector<1x512xf32> -> vector<1x512xf32>
    %73 = arith.addf %70, %72 : vector<1x512xf32>
    %c72_45 = arith.constant 72 : index
    %c64_46 = arith.constant 64 : index
    %74 = vector.load %arg2[%c72_45, %c64_46] : memref<120x128xf32, #tpu.memory_space<vmem>>, vector<1x20xf32>
    %cst_47 = arith.constant dense<0.000000e+00> : vector<1x512xf32>
    %75 = tpu.matmul %74, %67, %cst_47 {dimension_numbers = #tpu.dot_dimension_numbers<[1], [0], [0], [1], [0, 0, 1, 1], [], []>} : vector<1x20xf32>, vector<20x512xf32>, vector<1x512xf32> -> vector<1x512xf32>
    %c72_48 = arith.constant 72 : index
    %c96_49 = arith.constant 96 : index
    %76 = vector.load %arg2[%c72_48, %c96_49] : memref<120x128xf32, #tpu.memory_space<vmem>>, vector<1x20xf32>
    %cst_50 = arith.constant dense<0.000000e+00> : vector<1x512xf32>
    %77 = tpu.matmul %76, %68, %cst_50 {dimension_numbers = #tpu.dot_dimension_numbers<[1], [0], [0], [1], [0, 0, 1, 1], [], []>} : vector<1x20xf32>, vector<20x512xf32>, vector<1x512xf32> -> vector<1x512xf32>
    %78 = arith.addf %75, %77 : vector<1x512xf32>
    %c96_51 = arith.constant 96 : index
    %c3 = arith.constant 3 : index
    %79 = vector.load %arg2[%c96_51, %c3] : memref<120x128xf32, #tpu.memory_space<vmem>>, vector<1x1xf32>
    %c472_i32_52 = arith.constant 472 : i32
    %80 = tpu.dynamic_rotate %78 by %c472_i32_52 dim 1 : vector<1x512xf32>, i32 -> vector<1x512xf32>
    %81 = arith.addf %73, %80 : vector<1x512xf32>
    %82 = vector.broadcast %79 : vector<1x1xf32> to vector<1x512xf32>
    %83 = arith.addf %81, %82 : vector<1x512xf32>
    %cst_53 = arith.constant 0.000000e+00 : f32
    %84 = vector.broadcast %cst_53 : f32 to vector<1x512xf32>
    %85 = arith.maximumf %83, %84 : vector<1x512xf32>
    %c510_i32_54 = arith.constant 510 : i32
    %86 = tpu.dynamic_rotate %85 by %c510_i32_54 dim 1 : vector<1x512xf32>, i32 -> vector<1x512xf32>
    %87 = arith.maximumf %85, %86 : vector<1x512xf32>
    %c472_i32_55 = arith.constant 472 : i32
    %88 = tpu.dynamic_rotate %87 by %c472_i32_55 dim 1 : vector<1x512xf32>, i32 -> vector<1x512xf32>
    %89 = arith.maximumf %87, %88 : vector<1x512xf32>
    %cst_56 = arith.constant 0.000000e+00 : f32
    %90 = vector.broadcast %cst_56 : f32 to vector<1x512xf32>
    %91 = arith.maximumf %89, %90 : vector<1x512xf32>
    %c0_57 = arith.constant 0 : index
    %c0_58 = arith.constant 0 : index
    %92 = vector.load %arg3[%c0_57, %c0_58] : memref<8x512xf32, #tpu.memory_space<vmem>>, vector<3x512xf32>
    %93 = vector.broadcast %91 : vector<1x512xf32> to vector<3x512xf32>
    %94 = arith.mulf %92, %93 : vector<3x512xf32>
    %cst_59 = arith.constant dense<0.000000e+00> : vector<3xf32>
    %95 = vector.multi_reduction <add>, %94, %cst_59 [1] : vector<3x512xf32> to vector<3xf32>
    %96 = vector.shape_cast %95 : vector<3xf32> to vector<3x1xf32>
    %c96_60 = arith.constant 96 : index
    %c4 = arith.constant 4 : index
    %97 = vector.load %arg2[%c96_60, %c4] : memref<120x128xf32, #tpu.memory_space<vmem>>, vector<3x1xf32>
    %98 = arith.addf %96, %97 : vector<3x1xf32>
    %cst_61 = arith.constant 0.000000e+00 : f32
    %99 = vector.broadcast %cst_61 : f32 to vector<1x8x128xf32>
    %c0_62 = arith.constant 0 : index
    %c0_63 = arith.constant 0 : index
    %c0_64 = arith.constant 0 : index
    %100 = vector.load %arg4[%c0_62, %c0_63, %c0_64] : memref<1x8x128xf32, #tpu.memory_space<vmem>>, vector<1x8x128xf32>
    tpu.vector_store %arg4[%c0_62, %c0_63, %c0_64], %99 {strides = array<i32>} : memref<1x8x128xf32, #tpu.memory_space<vmem>>, vector<1x8x128xf32>,
    %c0_65 = arith.constant 0 : index
    %c0_66 = arith.constant 0 : index
    %c0_67 = arith.constant 0 : index
    %101 = vector.load %arg4[%c0_65, %c0_66, %c0_67] : memref<1x8x128xf32, #tpu.memory_space<vmem>>, vector<1x3x1xf32>
    %102 = vector.shape_cast %101 : vector<1x3x1xf32> to vector<3x1xf32>
    %103 = vector.shape_cast %98 : vector<3x1xf32> to vector<1x3x1xf32>
    tpu.vector_store %arg4[%c0_65, %c0_66, %c0_67], %103 {strides = array<i32>} : memref<1x8x128xf32, #tpu.memory_space<vmem>>, vector<1x3x1xf32>,
    return
  }
  func.func @transform_0(%arg0: i32) -> (i32, i32, i32) {
    %c0_i32 = arith.constant 0 : i32
    %c0_i32_0 = arith.constant 0 : i32
    %c0_i32_1 = arith.constant 0 : i32
    return %arg0, %c0_i32, %c0_i32_0 : i32, i32, i32
  }
  func.func @transform_1(%arg0: i32) -> (i32, i32) {
    %c0_i32 = arith.constant 0 : i32
    %c0_i32_0 = arith.constant 0 : i32
    %c0_i32_1 = arith.constant 0 : i32
    return %c0_i32, %c0_i32_0 : i32, i32
  }
  func.func @transform_2(%arg0: i32) -> (i32, i32) {
    %c0_i32 = arith.constant 0 : i32
    %c0_i32_0 = arith.constant 0 : i32
    %c0_i32_1 = arith.constant 0 : i32
    return %c0_i32, %c0_i32_0 : i32, i32
  }
  func.func @transform_3(%arg0: i32) -> (i32, i32, i32) {
    %c0_i32 = arith.constant 0 : i32
    %c0_i32_0 = arith.constant 0 : i32
    %c0_i32_1 = arith.constant 0 : i32
    return %arg0, %c0_i32, %c0_i32_0 : i32, i32, i32
  }
}

</mosaic_0001>

<llo_original>
// kernel: model_cnn_forward_batch.1
$region0: #{model_cnn_forward_batch.1}
  #allocation0 [shape = 'u32[]', space=smem, size = 0x4, offset = 0x4, fixed_abs, tag = 'smem constant byte address 0x4 - core index']
  #allocation1 [shape = 'u32[72,128]{1,0:T(1,128)}', space=vmem, size = 0x9000, scoped, tag = 'internal scratch']
  %s0 = inlined_call_operand.vmem [shape: f32[8,1,512], index: 0, kind: input, shape index: {}]
  %s1 = inlined_call_operand.vmem [shape: f32[120,128], index: 1, kind: input, shape index: {}]
  %s2 = inlined_call_operand.vmem [shape: f32[8,512], index: 2, kind: input, shape index: {}]
  %s3 = inlined_call_operand.vmem [shape: f32[8,8,128], index: 3, kind: output, shape index: {}]
  %s4 = sld [smem:[#allocation0]]
  $region45: #{model_cnn_forward_batch.1} parent=0
    _
  %s6 = ssub.s32 1, %s4
  %s7 = scalar_select 0, %s6, %s4
  loop: start=0, step=1, limit=10
  $region2: #{model_cnn_forward_batch.1} parent=0 // loop_pre_header
    _
  $region3: #{model_cnn_forward_batch.1} parent=0 // loop_header
    %s9 = sphi 0, %s13
    %p10 = scmp.ge.s32.totalorder %s9, 10
    %s19 = sphi 0, %s21
    %s22 = sphi 0, %s19
    %s23 = sphi 0, %s22
    %s39 = sphi 0, %s23
    %s43 = sphi 0, %s43
    %s45 = sphi 0, %s43
    %s46 = sphi 0, %s45
    %s60 = sphi 0, %s46
    %s64 = sphi 0, %s64
    %s66 = sphi 0, %s64
    %s67 = sphi 0, %s66
    %s81 = sphi 0, %s67
    %s87 = sphi 0, %s89
    %s90 = sphi 0, %s87
    %s91 = sphi 0, %s90
    %s107 = sphi 0, %s91
  $region4: #{model_cnn_forward_batch.1} parent=0 // loop_header_branch
    %12 = sbr.rel (%p10) target = $region8
  $region5: #{model_cnn_forward_batch.1} parent=0 // loop_body
    %s14 = ssub.s32 %s9, 1
    %s15 = ssub.s32 %s9, 2
    %s16 = sadd.s32 %s9, 1
    %s17 = ssub.s32 %s9, %s16
    %p18 = scmp.eq.s32.totalorder %s17, 0
    %s20 = sadd.s32 %s19, 1
    %s21 = scalar_select %p18, %s19, %s20
    %p24 = pneg %p18
    %p25 = scmp.eq.s32.totalorder %s9, 7
    %p26 = por %p24, %p25
    %p27 = scmp.ne.s32.totalorder %s19, %s22
    %p28 = scmp.eq.s32.totalorder %s9, 0
    %p29 = por %p27, %p28
    %p30 = scmp.ne.s32.totalorder %s19, %s22
    %p31 = scmp.eq.s32.totalorder %s14, 7
    %p32 = por %p30, %p31
    %p33 = scmp.ne.s32.totalorder %s22, %s23
    %p34 = scmp.eq.s32.totalorder %s14, 0
    %p35 = por %p33, %p34
    %p36 = scmp.ne.s32.totalorder %s22, %s23
    %p37 = scmp.eq.s32.totalorder %s15, 7
    %p38 = por %p36, %p37
    %p40 = scmp.ne.s32.totalorder %s23, %s39
    %p41 = scmp.eq.s32.totalorder %s15, 0
    %p42 = por %p40, %p41
    %s44 = sadd.s32 %s43, 1
    %p47 = scmp.eq.s32.totalorder %s9, 7
    %p48 = scmp.ne.s32.totalorder %s43, %s45
    %p49 = scmp.eq.s32.totalorder %s9, 0
    %p50 = por %p48, %p49
    %p51 = scmp.ne.s32.totalorder %s43, %s45
    %p52 = scmp.eq.s32.totalorder %s14, 7
    %p53 = por %p51, %p52
    %p54 = scmp.ne.s32.totalorder %s45, %s46
    %p55 = scmp.eq.s32.totalorder %s14, 0
    %p56 = por %p54, %p55
    %p57 = scmp.ne.s32.totalorder %s45, %s46
    %p58 = scmp.eq.s32.totalorder %s15, 7
    %p59 = por %p57, %p58
    %p61 = scmp.ne.s32.totalorder %s46, %s60
    %p62 = scmp.eq.s32.totalorder %s15, 0
    %p63 = por %p61, %p62
    %s65 = sadd.s32 %s64, 1
    %p68 = scmp.eq.s32.totalorder %s9, 7
    %p69 = scmp.ne.s32.totalorder %s64, %s66
    %p70 = scmp.eq.s32.totalorder %s9, 0
    %p71 = por %p69, %p70
    %p72 = scmp.ne.s32.totalorder %s64, %s66
    %p73 = scmp.eq.s32.totalorder %s14, 7
    %p74 = por %p72, %p73
    %p75 = scmp.ne.s32.totalorder %s66, %s67
    %p76 = scmp.eq.s32.totalorder %s14, 0
    %p77 = por %p75, %p76
    %p78 = scmp.ne.s32.totalorder %s66, %s67
    %p79 = scmp.eq.s32.totalorder %s15, 7
    %p80 = por %p78, %p79
    %p82 = scmp.ne.s32.totalorder %s67, %s81
    %p83 = scmp.eq.s32.totalorder %s15, 0
    %p84 = por %p82, %p83
    %s85 = ssub.s32 %s9, %s16
    %p86 = scmp.eq.s32.totalorder %s85, 0
    %s88 = sadd.s32 %s87, 1
    %s89 = scalar_select %p86, %s87, %s88
    %p92 = pneg %p86
    %p93 = scmp.eq.s32.totalorder %s9, 7
    %p94 = por %p92, %p93
    %p95 = scmp.ne.s32.totalorder %s87, %s90
    %p96 = scmp.eq.s32.totalorder %s9, 0
    %p97 = por %p95, %p96
    %p98 = scmp.ne.s32.totalorder %s87, %s90
    %p99 = scmp.eq.s32.totalorder %s14, 7
    %p100 = por %p98, %p99
    %p101 = scmp.ne.s32.totalorder %s90, %s91
    %p102 = scmp.eq.s32.totalorder %s14, 0
    %p103 = por %p101, %p102
    %p104 = scmp.ne.s32.totalorder %s90, %s91
    %p105 = scmp.eq.s32.totalorder %s15, 7
    %p106 = por %p104, %p105
    %p108 = scmp.ne.s32.totalorder %s91, %s107
    %p109 = scmp.eq.s32.totalorder %s15, 0
    %p110 = por %p108, %p109
    %p111 = scmp.le.s32.totalorder 1, %s9
    %p112 = scmp.lt.s32.totalorder %s9, 9
    %p113 = pnand %p111, %p112
    %p114 = pneg %p113
    // Predicated region
    $region9: #{model_cnn_forward_batch.1} parent=5 // pred_check
      _
    $region10: #{model_cnn_forward_batch.1} parent=5 // pred_check_branch
      %116 = sbr.rel (%p113) target = $region12
    $region11: #{model_cnn_forward_batch.1} parent=5 // pred_region
      %s117 = ssub.s32 %s9, 1
      // Predicated region
      $region13: #{model_cnn_forward_batch.1} parent=11 // pred_check
        %p118 = pneg %p56
      $region14: #{model_cnn_forward_batch.1} parent=11 // pred_check_branch
        %120 = sbr.rel (%p118) target = $region16
      $region15: #{model_cnn_forward_batch.1} parent=11 // pred_region
        _
      $region16: #{model_cnn_forward_batch.1} parent=11 // pred_fallthru
        _
      // Predicated region
      $region17: #{model_cnn_forward_batch.1} parent=11 // pred_check
        %p121 = pneg %p77
      $region18: #{model_cnn_forward_batch.1} parent=11 // pred_check_branch
        %123 = sbr.rel (%p121) target = $region20
      $region19: #{model_cnn_forward_batch.1} parent=11 // pred_region
        _
      $region20: #{model_cnn_forward_batch.1} parent=11 // pred_fallthru
        _
    $region12: #{model_cnn_forward_batch.1} parent=5 // pred_fallthru
      _
    %p124 = scmp.lt.s32.totalorder %s9, 8
    // Predicated region
    $region21: #{model_cnn_forward_batch.1} parent=5 // pred_check
      %p125 = pneg %p124
    $region22: #{model_cnn_forward_batch.1} parent=5 // pred_check_branch
      %127 = sbr.rel (%p125) target = $region24
    $region23: #{model_cnn_forward_batch.1} parent=5 // pred_region
      // Predicated region
      $region25: #{model_cnn_forward_batch.1} parent=23 // pred_check
        %p128 = pneg %p29
      $region26: #{model_cnn_forward_batch.1} parent=23 // pred_check_branch
        %130 = sbr.rel (%p128) target = $region28
      $region27: #{model_cnn_forward_batch.1} parent=23 // pred_region
        %p131 = scmp.lt.s32.totalorder %s9, 7
        %s132 = scalar_select %p131, %s9, 7
        %s133 = smul.addr %s132, 4
        %s134 = scalar_lea.vmem %s0, %s133
      $region28: #{model_cnn_forward_batch.1} parent=23 // pred_fallthru
        _
    $region24: #{model_cnn_forward_batch.1} parent=5 // pred_fallthru
      _
    %p135 = scmp.le.s32.totalorder 1, %s9
    %p136 = scmp.lt.s32.totalorder %s9, 9
    %p137 = pnand %p135, %p136
    %p138 = pneg %p137
    // Predicated region
    $region29: #{model_cnn_forward_batch.1} parent=5 // pred_check
      _
    $region30: #{model_cnn_forward_batch.1} parent=5 // pred_check_branch
      %140 = sbr.rel (%p137) target = $region32
    $region31: #{model_cnn_forward_batch.1} parent=5 // pred_region
      %s141 = ssub.s32 %s9, 1
      %p142 = scmp.lt.s32.totalorder %s14, 7
      %s143 = scalar_select %p142, %s14, 7
      %s144 = smul.addr %s143, 4
      %s145 = scalar_lea.vmem %s0, %s144
      %p146 = pneg %p35
      %p147 = pneg %p32
      %p148 = pneg %p56
      %p149 = pneg %p53
      %p150 = pneg %p77
      %p151 = pneg %p74
      %p152 = pneg %p103
      %p153 = pneg %p100
      %p154 = scmp.lt.s32.totalorder %s14, 7
      %s155 = scalar_select %p154, %s14, 7
      %s156 = smul.addr %s155, 8
      %s157 = scalar_lea.vmem %s3, %s156
      %p158 = scmp.lt.s32.totalorder %s14, 7
      %s159 = scalar_select %p158, %s14, 7
      %s160 = smul.addr %s159, 4
      %s161 = scalar_lea.vmem %s0, %s160
      %p162 = scmp.lt.s32.totalorder %s14, 7
      %s163 = scalar_select %p162, %s14, 7
      %s164 = smul.addr %s163, 8
      %s165 = scalar_lea.vmem %s3, %s164
      %v166 = vld [vmem:[%s161] sm:$0xf]
      %v168 = vperm.slane %v166, 0
      %v169 = vperm.slane %v166, 1
      %v170 = vperm.slane %v166, 2
      %v171 = vperm.slane %v166, 3
      %176 = vrot.lane.b32.xlu0 %v168, 127
      %v177 = vpop.permute.xlu0 %176
      %178 = vrot.lane.b32.xlu0 %v169, 127
      %v179 = vpop.permute.xlu0 %178
      %180 = vrot.lane.b32.xlu0 %v170, 127
      %v181 = vpop.permute.xlu0 %180
      %182 = vrot.lane.b32.xlu0 %v171, 127
      %v183 = vpop.permute.xlu0 %182
      %v184 = vlaneseq
      %v185 = vand.u32 %v184, 127
      %vm186 = vcmp.lt.s32.totalorder %v185, 127
      %v187 = vsel %vm186, %v181, %v183
      %v188 = vsel %vm186, %v179, %v181
      %v189 = vsel %vm186, %v177, %v179
      %v190 = vsel %vm186, %v183, %v177
      %v191 = vld [vmem:[%s1] sm:$0xff]
      %v192 = vld [vmem:[%s1 + $0x8] sm:$0xff]
      %v193 = vld [vmem:[%s1 + $0x10] sm:$0xf]
      %195 = vset.pattern.permute.xlu0 0
      %196 = vperm.xlu0 %195, %v191
      %v197 = vpop.permute.xlu0 %196
      %200 = vset.pattern.permute.xlu0 0
      %201 = vperm.xlu0 %200, %v192
      %v202 = vpop.permute.xlu0 %201
      %205 = vset.pattern.permute.xlu0 0
      %206 = vperm.xlu0 %205, %v193
      %v207 = vpop.permute.xlu0 %206
      %v209 = vmul.f32 %v197, %v168
      %v210 = vmul.f32 %v197, %v169
      %v211 = vmul.f32 %v197, %v170
      %v212 = vmul.f32 %v197, %v171
      %v213 = vmul.f32 %v202, %v168
      %v214 = vmul.f32 %v202, %v169
      %v215 = vmul.f32 %v202, %v170
      %v216 = vmul.f32 %v202, %v171
      %v217 = vmul.f32 %v207, %v168
      %v218 = vmul.f32 %v207, %v169
      %v219 = vmul.f32 %v207, %v170
      %v220 = vmul.f32 %v207, %v171
      %221 = vset.pattern.permute.xlu0 32
      %222 = vperm.xlu0 %221, %v191
      %v223 = vpop.permute.xlu0 %222
      %225 = vset.pattern.permute.xlu0 32
      %226 = vperm.xlu0 %225, %v192
      %v227 = vpop.permute.xlu0 %226
      %229 = vset.pattern.permute.xlu0 32
      %230 = vperm.xlu0 %229, %v193
      %v231 = vpop.permute.xlu0 %230
      %v233 = vperm.slane %v189, 0
      %v234 = vperm.slane %v188, 0
      %v235 = vperm.slane %v187, 0
      %v236 = vperm.slane %v190, 0
      %v237 = vmul.f32 %v223, %v233
      %v238 = vmul.f32 %v223, %v234
      %v239 = vmul.f32 %v223, %v235
      %v240 = vmul.f32 %v223, %v236
      %v241 = vmul.f32 %v227, %v233
      %v242 = vmul.f32 %v227, %v234
      %v243 = vmul.f32 %v227, %v235
      %v244 = vmul.f32 %v227, %v236
      %v245 = vmul.f32 %v231, %v233
      %v246 = vmul.f32 %v231, %v234
      %v247 = vmul.f32 %v231, %v235
      %v248 = vmul.f32 %v231, %v236
      %v249 = vadd.f32 %v209, %v237
      %v250 = vadd.f32 %v210, %v238
      %v251 = vadd.f32 %v211, %v239
      %v252 = vadd.f32 %v212, %v240
      %v253 = vadd.f32 %v213, %v241
      %v254 = vadd.f32 %v214, %v242
      %v255 = vadd.f32 %v215, %v243
      %v256 = vadd.f32 %v216, %v244
      %v257 = vadd.f32 %v217, %v245
      %v258 = vadd.f32 %v218, %v246
      %v259 = vadd.f32 %v219, %v247
      %v260 = vadd.f32 %v220, %v248
      %261 = vset.pattern.permute.xlu0 64
      %262 = vperm.xlu0 %261, %v191
      %v263 = vpop.permute.xlu0 %262
      %265 = vset.pattern.permute.xlu0 64
      %266 = vperm.xlu0 %265, %v192
      %v267 = vpop.permute.xlu0 %266
      %269 = vset.pattern.permute.xlu0 64
      %270 = vperm.xlu0 %269, %v193
      %v271 = vpop.permute.xlu0 %270
      %v273 = vmul.f32 %v263, %v168
      %v274 = vmul.f32 %v263, %v169
      %v275 = vmul.f32 %v263, %v170
      %v276 = vmul.f32 %v263, %v171
      %v277 = vmul.f32 %v267, %v168
      %v278 = vmul.f32 %v267, %v169
      %v279 = vmul.f32 %v267, %v170
      %v280 = vmul.f32 %v267, %v171
      %v281 = vmul.f32 %v271, %v168
      %v282 = vmul.f32 %v271, %v169
      %v283 = vmul.f32 %v271, %v170
      %v284 = vmul.f32 %v271, %v171
      %285 = vset.pattern.permute.xlu0 96
      %286 = vperm.xlu0 %285, %v191
      %v287 = vpop.permute.xlu0 %286
      %289 = vset.pattern.permute.xlu0 96
      %290 = vperm.xlu0 %289, %v192
      %v291 = vpop.permute.xlu0 %290
      %293 = vset.pattern.permute.xlu0 96
      %294 = vperm.xlu0 %293, %v193
      %v295 = vpop.permute.xlu0 %294
      %v297 = vmul.f32 %v287, %v233
      %v298 = vmul.f32 %v287, %v234
      %v299 = vmul.f32 %v287, %v235
      %v300 = vmul.f32 %v287, %v236
      %v301 = vmul.f32 %v291, %v233
      %v302 = vmul.f32 %v291, %v234
      %v303 = vmul.f32 %v291, %v235
      %v304 = vmul.f32 %v291, %v236
      %v305 = vmul.f32 %v295, %v233
      %v306 = vmul.f32 %v295, %v234
      %v307 = vmul.f32 %v295, %v235
      %v308 = vmul.f32 %v295, %v236
      %v309 = vadd.f32 %v273, %v297
      %v310 = vadd.f32 %v274, %v298
      %v311 = vadd.f32 %v275, %v299
      %v312 = vadd.f32 %v276, %v300
      %v313 = vadd.f32 %v277, %v301
      %v314 = vadd.f32 %v278, %v302
      %v315 = vadd.f32 %v279, %v303
      %v316 = vadd.f32 %v280, %v304
      %v317 = vadd.f32 %v281, %v305
      %v318 = vadd.f32 %v282, %v306
      %v319 = vadd.f32 %v283, %v307
      %v320 = vadd.f32 %v284, %v308
      %v321 = vld [vmem:[%s1 + $0x60] sm:$0xff]
      %v322 = vld [vmem:[%s1 + $0x68] sm:$0xff]
      %v323 = vld [vmem:[%s1 + $0x70] sm:$0xf]
      %324 = vrot.lane.b32.xlu0 %v309, 108
      %v325 = vpop.permute.xlu0 %324
      %326 = vrot.lane.b32.xlu0 %v313, 108
      %v327 = vpop.permute.xlu0 %326
      %328 = vrot.lane.b32.xlu0 %v317, 108
      %v329 = vpop.permute.xlu0 %328
      %330 = vrot.lane.b32.xlu0 %v310, 108
      %v331 = vpop.permute.xlu0 %330
      %332 = vrot.lane.b32.xlu0 %v314, 108
      %v333 = vpop.permute.xlu0 %332
      %334 = vrot.lane.b32.xlu0 %v318, 108
      %v335 = vpop.permute.xlu0 %334
      %336 = vrot.lane.b32.xlu0 %v311, 108
      %v337 = vpop.permute.xlu0 %336
      %338 = vrot.lane.b32.xlu0 %v315, 108
      %v339 = vpop.permute.xlu0 %338
      %340 = vrot.lane.b32.xlu0 %v319, 108
      %v341 = vpop.permute.xlu0 %340
      %342 = vrot.lane.b32.xlu0 %v312, 108
      %v343 = vpop.permute.xlu0 %342
      %344 = vrot.lane.b32.xlu0 %v316, 108
      %v345 = vpop.permute.xlu0 %344
      %346 = vrot.lane.b32.xlu0 %v320, 108
      %v347 = vpop.permute.xlu0 %346
      %vm348 = vcmp.lt.s32.totalorder %v185, 108
      %v349 = vsel %vm348, %v337, %v343
      %v350 = vsel %vm348, %v339, %v345
      %v351 = vsel %vm348, %v341, %v347
      %v352 = vsel %vm348, %v331, %v337
      %v353 = vsel %vm348, %v333, %v339
      %v354 = vsel %vm348, %v335, %v341
      %v355 = vsel %vm348, %v325, %v331
      %v356 = vsel %vm348, %v327, %v333
      %v357 = vsel %vm348, %v329, %v335
      %v358 = vsel %vm348, %v343, %v325
      %v359 = vsel %vm348, %v345, %v327
      %v360 = vsel %vm348, %v347, %v329
      %v361 = vadd.f32 %v249, %v355
      %v362 = vadd.f32 %v250, %v352
      %v363 = vadd.f32 %v251, %v349
      %v364 = vadd.f32 %v252, %v358
      %v365 = vadd.f32 %v253, %v356
      %v366 = vadd.f32 %v254, %v353
      %v367 = vadd.f32 %v255, %v350
      %v368 = vadd.f32 %v256, %v359
      %v369 = vadd.f32 %v257, %v357
      %v370 = vadd.f32 %v258, %v354
      %v371 = vadd.f32 %v259, %v351
      %v372 = vadd.f32 %v260, %v360
      %374 = vset.pattern.permute.xlu0 0
      %375 = vperm.xlu0 %374, %v321
      %v376 = vpop.permute.xlu0 %375
      %379 = vset.pattern.permute.xlu0 0
      %380 = vperm.xlu0 %379, %v322
      %v381 = vpop.permute.xlu0 %380
      %384 = vset.pattern.permute.xlu0 0
      %385 = vperm.xlu0 %384, %v323
      %v386 = vpop.permute.xlu0 %385
      %v388 = vadd.f32 %v361, %v376
      %v389 = vadd.f32 %v362, %v376
      %v390 = vadd.f32 %v363, %v376
      %v391 = vadd.f32 %v364, %v376
      %v392 = vadd.f32 %v365, %v381
      %v393 = vadd.f32 %v366, %v381
      %v394 = vadd.f32 %v367, %v381
      %v395 = vadd.f32 %v368, %v381
      %v396 = vadd.f32 %v369, %v386
      %v397 = vadd.f32 %v370, %v386
      %v398 = vadd.f32 %v371, %v386
      %v399 = vadd.f32 %v372, %v386
      %v400 = vmax.f32 %v388, 0.0
      %v401 = vmax.f32 %v389, 0.0
      %v402 = vmax.f32 %v390, 0.0
      %v403 = vmax.f32 %v391, 0.0
      %v404 = vmax.f32 %v392, 0.0
      %v405 = vmax.f32 %v393, 0.0
      %v406 = vmax.f32 %v394, 0.0
      %v407 = vmax.f32 %v395, 0.0
      %v408 = vmax.f32 %v396, 0.0
      %v409 = vmax.f32 %v397, 0.0
      %v410 = vmax.f32 %v398, 0.0
      %v411 = vmax.f32 %v399, 0.0
      %412 = vrot.lane.b32.xlu0 %v400, 127
      %v413 = vpop.permute.xlu0 %412
      %414 = vrot.lane.b32.xlu0 %v404, 127
      %v415 = vpop.permute.xlu0 %414
      %416 = vrot.lane.b32.xlu0 %v408, 127
      %v417 = vpop.permute.xlu0 %416
      %418 = vrot.lane.b32.xlu0 %v401, 127
      %v419 = vpop.permute.xlu0 %418
      %420 = vrot.lane.b32.xlu0 %v405, 127
      %v421 = vpop.permute.xlu0 %420
      %422 = vrot.lane.b32.xlu0 %v409, 127
      %v423 = vpop.permute.xlu0 %422
      %424 = vrot.lane.b32.xlu0 %v402, 127
      %v425 = vpop.permute.xlu0 %424
      %426 = vrot.lane.b32.xlu0 %v406, 127
      %v427 = vpop.permute.xlu0 %426
      %428 = vrot.lane.b32.xlu0 %v410, 127
      %v429 = vpop.permute.xlu0 %428
      %430 = vrot.lane.b32.xlu0 %v403, 127
      %v431 = vpop.permute.xlu0 %430
      %432 = vrot.lane.b32.xlu0 %v407, 127
      %v433 = vpop.permute.xlu0 %432
      %434 = vrot.lane.b32.xlu0 %v411, 127
      %v435 = vpop.permute.xlu0 %434
      %v436 = vsel %vm186, %v425, %v431
      %v437 = vsel %vm186, %v427, %v433
      %v438 = vsel %vm186, %v429, %v435
      %v439 = vsel %vm186, %v419, %v425
      %v440 = vsel %vm186, %v421, %v427
      %v441 = vsel %vm186, %v423, %v429
      %v442 = vsel %vm186, %v413, %v419
      %v443 = vsel %vm186, %v415, %v421
      %v444 = vsel %vm186, %v417, %v423
      %v445 = vsel %vm186, %v431, %v413
      %v446 = vsel %vm186, %v433, %v415
      %v447 = vsel %vm186, %v435, %v417
      %v448 = vld [vmem:[%s1 + $0x18] sm:$0xff]
      %v449 = vld [vmem:[%s1 + $0x20] sm:$0xff]
      %v450 = vld [vmem:[%s1 + $0x28] sm:$0xf]
      %454 = vrot.lane.b32.xlu0 %v448, 96
      %v455 = vpop.permute.xlu0 %454
      %456 = vrot.lane.b32.xlu0 %v449, 96
      %v457 = vpop.permute.xlu0 %456
      %458 = vrot.lane.b32.xlu0 %v450, 96
      %v459 = vpop.permute.xlu0 %458
      %vm460 = vcmask 162816
      %v461 = vsel %vm460, %v455, 0
      %v463 = vsel %vm460, %v457, 0
      %v465 = vsel %vm460, %v459, 0
      %vm467 = vcmask 1043456
      %v469 = vsel %vm467, %v444, 0
      %v472 = vsel %vm467, %v441, 0
      %v475 = vsel %vm467, %v438, 0
      %v478 = vsel %vm467, %v447, 0
      %480 = vmatpush.msra.mxu0 0.0
      %481 = vmatpush.msra.mxu0 0.0
      %482 = vmatpush.msra.mxu0 0.0
      %483 = vmatpush.msra.mxu0 0.0
      %484 = vmatpush.msra.mxu0 0.0
      %485 = vmatpush.msra.mxu0 0.0
      %486 = vmatpush.msra.mxu0 0.0
      %487 = vmatpush.msra.mxu0 0.0
      %488 = vmatpush.msra.mxu0 0.0
      %489 = vmatpush.msra.mxu0 0.0
      %490 = vmatpush.msra.mxu0 0.0
      %491 = vmatpush.msra.mxu0 0.0
      %492 = vmatpush.msra.mxu0 0.0
      %493 = vmatpush.msra.mxu0 %v469
      %494 = vmatpush.msra.mxu0 %v443
      %495 = vmatpush.msra.mxu0 %v442
      %496 = vmatmul.f32.gmra.mxu0 %v461
      %v497 = vpop.f32.mrf.mxu0
      %v498 = vadd.f32 0.0, %v497
      %499 = vmatmul.f32.gmra.mxu0 %v463
      %v500 = vpop.f32.mrf.mxu0
      %v501 = vadd.f32 0.0, %v500
      %502 = vmatmul.f32.gmra.mxu0 %v465
      %v503 = vpop.f32.mrf.mxu0
      %v504 = vadd.f32 0.0, %v503
      %505 = vdwg.mxu0
      %506 = vmatpush.msra.mxu0 0.0
      %507 = vmatpush.msra.mxu0 0.0
      %508 = vmatpush.msra.mxu0 0.0
      %509 = vmatpush.msra.mxu0 0.0
      %510 = vmatpush.msra.mxu0 0.0
      %511 = vmatpush.msra.mxu0 0.0
      %512 = vmatpush.msra.mxu0 0.0
      %513 = vmatpush.msra.mxu0 0.0
      %514 = vmatpush.msra.mxu0 0.0
      %515 = vmatpush.msra.mxu0 0.0
      %516 = vmatpush.msra.mxu0 0.0
      %517 = vmatpush.msra.mxu0 0.0
      %518 = vmatpush.msra.mxu0 0.0
      %519 = vmatpush.msra.mxu0 %v472
      %520 = vmatpush.msra.mxu0 %v440
      %521 = vmatpush.msra.mxu0 %v439
      %522 = vmatmul.f32.gmra.mxu0 %v461
      %v523 = vpop.f32.mrf.mxu0
      %v524 = vadd.f32 0.0, %v523
      %525 = vmatmul.f32.gmra.mxu0 %v463
      %v526 = vpop.f32.mrf.mxu0
      %v527 = vadd.f32 0.0, %v526
      %528 = vmatmul.f32.gmra.mxu0 %v465
      %v529 = vpop.f32.mrf.mxu0
      %v530 = vadd.f32 0.0, %v529
      %531 = vdwg.mxu0
      %532 = vmatpush.msra.mxu0 0.0
      %533 = vmatpush.msra.mxu0 0.0
      %534 = vmatpush.msra.mxu0 0.0
      %535 = vmatpush.msra.mxu0 0.0
      %536 = vmatpush.msra.mxu0 0.0
      %537 = vmatpush.msra.mxu0 0.0
      %538 = vmatpush.msra.mxu0 0.0
      %539 = vmatpush.msra.mxu0 0.0
      %540 = vmatpush.msra.mxu0 0.0
      %541 = vmatpush.msra.mxu0 0.0
      %542 = vmatpush.msra.mxu0 0.0
      %543 = vmatpush.msra.mxu0 0.0
      %544 = vmatpush.msra.mxu0 0.0
      %545 = vmatpush.msra.mxu0 %v475
      %546 = vmatpush.msra.mxu0 %v437
      %547 = vmatpush.msra.mxu0 %v436
      %548 = vmatmul.f32.gmra.mxu0 %v461
      %v549 = vpop.f32.mrf.mxu0
      %v550 = vadd.f32 0.0, %v549
      %551 = vmatmul.f32.gmra.mxu0 %v463
      %v552 = vpop.f32.mrf.mxu0
      %v553 = vadd.f32 0.0, %v552
      %554 = vmatmul.f32.gmra.mxu0 %v465
      %v555 = vpop.f32.mrf.mxu0
      %v556 = vadd.f32 0.0, %v555
      %557 = vdwg.mxu0
      %558 = vmatpush.msra.mxu0 0.0
      %559 = vmatpush.msra.mxu0 0.0
      %560 = vmatpush.msra.mxu0 0.0
      %561 = vmatpush.msra.mxu0 0.0
      %562 = vmatpush.msra.mxu0 0.0
      %563 = vmatpush.msra.mxu0 0.0
      %564 = vmatpush.msra.mxu0 0.0
      %565 = vmatpush.msra.mxu0 0.0
      %566 = vmatpush.msra.mxu0 0.0
      %567 = vmatpush.msra.mxu0 0.0
      %568 = vmatpush.msra.mxu0 0.0
      %569 = vmatpush.msra.mxu0 0.0
      %570 = vmatpush.msra.mxu0 0.0
      %571 = vmatpush.msra.mxu0 %v478
      %572 = vmatpush.msra.mxu0 %v446
      %573 = vmatpush.msra.mxu0 %v445
      %574 = vmatmul.f32.gmra.mxu0 %v461
      %v575 = vpop.f32.mrf.mxu0
      %v576 = vadd.f32 0.0, %v575
      %577 = vmatmul.f32.gmra.mxu0 %v463
      %v578 = vpop.f32.mrf.mxu0
      %v579 = vadd.f32 0.0, %v578
      %580 = vmatmul.f32.gmra.mxu0 %v465
      %v581 = vpop.f32.mrf.mxu0
      %v582 = vadd.f32 0.0, %v581
      %583 = vdwg.mxu0
      %v584 = vsel %vm460, %v448, 0
      %v586 = vsel %vm460, %v449, 0
      %v588 = vsel %vm460, %v450, 0
      %v591 = vsel %vm467, %v408, 0
      %v594 = vsel %vm467, %v409, 0
      %v597 = vsel %vm467, %v410, 0
      %v600 = vsel %vm467, %v411, 0
      %602 = vmatpush.msra.mxu0 0.0
      %603 = vmatpush.msra.mxu0 0.0
      %604 = vmatpush.msra.mxu0 0.0
      %605 = vmatpush.msra.mxu0 0.0
      %606 = vmatpush.msra.mxu0 0.0
      %607 = vmatpush.msra.mxu0 0.0
      %608 = vmatpush.msra.mxu0 0.0
      %609 = vmatpush.msra.mxu0 0.0
      %610 = vmatpush.msra.mxu0 0.0
      %611 = vmatpush.msra.mxu0 0.0
      %612 = vmatpush.msra.mxu0 0.0
      %613 = vmatpush.msra.mxu0 0.0
      %614 = vmatpush.msra.mxu0 0.0
      %615 = vmatpush.msra.mxu0 %v591
      %616 = vmatpush.msra.mxu0 %v404
      %617 = vmatpush.msra.mxu0 %v400
      %618 = vmatmul.f32.gmra.mxu0 %v584
      %v619 = vpop.f32.mrf.mxu0
      %v620 = vadd.f32 %v498, %v619
      %621 = vmatmul.f32.gmra.mxu0 %v586
      %v622 = vpop.f32.mrf.mxu0
      %v623 = vadd.f32 %v501, %v622
      %624 = vmatmul.f32.gmra.mxu0 %v588
      %v625 = vpop.f32.mrf.mxu0
      %v626 = vadd.f32 %v504, %v625
      %627 = vdwg.mxu0
      %628 = vmatpush.msra.mxu0 0.0
      %629 = vmatpush.msra.mxu0 0.0
      %630 = vmatpush.msra.mxu0 0.0
      %631 = vmatpush.msra.mxu0 0.0
      %632 = vmatpush.msra.mxu0 0.0
      %633 = vmatpush.msra.mxu0 0.0
      %634 = vmatpush.msra.mxu0 0.0
      %635 = vmatpush.msra.mxu0 0.0
      %636 = vmatpush.msra.mxu0 0.0
      %637 = vmatpush.msra.mxu0 0.0
      %638 = vmatpush.msra.mxu0 0.0
      %639 = vmatpush.msra.mxu0 0.0
      %640 = vmatpush.msra.mxu0 0.0
      %641 = vmatpush.msra.mxu0 %v594
      %642 = vmatpush.msra.mxu0 %v405
      %643 = vmatpush.msra.mxu0 %v401
      %644 = vmatmul.f32.gmra.mxu0 %v584
      %v645 = vpop.f32.mrf.mxu0
      %v646 = vadd.f32 %v524, %v645
      %647 = vmatmul.f32.gmra.mxu0 %v586
      %v648 = vpop.f32.mrf.mxu0
      %v649 = vadd.f32 %v527, %v648
      %650 = vmatmul.f32.gmra.mxu0 %v588
      %v651 = vpop.f32.mrf.mxu0
      %v652 = vadd.f32 %v530, %v651
      %653 = vdwg.mxu0
      %654 = vmatpush.msra.mxu0 0.0
      %655 = vmatpush.msra.mxu0 0.0
      %656 = vmatpush.msra.mxu0 0.0
      %657 = vmatpush.msra.mxu0 0.0
      %658 = vmatpush.msra.mxu0 0.0
      %659 = vmatpush.msra.mxu0 0.0
      %660 = vmatpush.msra.mxu0 0.0
      %661 = vmatpush.msra.mxu0 0.0
      %662 = vmatpush.msra.mxu0 0.0
      %663 = vmatpush.msra.mxu0 0.0
      %664 = vmatpush.msra.mxu0 0.0
      %665 = vmatpush.msra.mxu0 0.0
      %666 = vmatpush.msra.mxu0 0.0
      %667 = vmatpush.msra.mxu0 %v597
      %668 = vmatpush.msra.mxu0 %v406
      %669 = vmatpush.msra.mxu0 %v402
      %670 = vmatmul.f32.gmra.mxu0 %v584
      %v671 = vpop.f32.mrf.mxu0
      %v672 = vadd.f32 %v550, %v671
      %673 = vmatmul.f32.gmra.mxu0 %v586
      %v674 = vpop.f32.mrf.mxu0
      %v675 = vadd.f32 %v553, %v674
      %676 = vmatmul.f32.gmra.mxu0 %v588
      %v677 = vpop.f32.mrf.mxu0
      %v678 = vadd.f32 %v556, %v677
      %679 = vdwg.mxu0
      %680 = vmatpush.msra.mxu0 0.0
      %681 = vmatpush.msra.mxu0 0.0
      %682 = vmatpush.msra.mxu0 0.0
      %683 = vmatpush.msra.mxu0 0.0
      %684 = vmatpush.msra.mxu0 0.0
      %685 = vmatpush.msra.mxu0 0.0
      %686 = vmatpush.msra.mxu0 0.0
      %687 = vmatpush.msra.mxu0 0.0
      %688 = vmatpush.msra.mxu0 0.0
      %689 = vmatpush.msra.mxu0 0.0
      %690 = vmatpush.msra.mxu0 0.0
      %691 = vmatpush.msra.mxu0 0.0
      %692 = vmatpush.msra.mxu0 0.0
      %693 = vmatpush.msra.mxu0 %v600
      %694 = vmatpush.msra.mxu0 %v407
      %695 = vmatpush.msra.mxu0 %v403
      %696 = vmatmul.f32.gmra.mxu0 %v584
      %v697 = vpop.f32.mrf.mxu0
      %v698 = vadd.f32 %v576, %v697
      %699 = vmatmul.f32.gmra.mxu0 %v586
      %v700 = vpop.f32.mrf.mxu0
      %v701 = vadd.f32 %v579, %v700
      %702 = vmatmul.f32.gmra.mxu0 %v588
      %v703 = vpop.f32.mrf.mxu0
      %v704 = vadd.f32 %v582, %v703
      %705 = vdwg.mxu0
      %706 = vrot.lane.b32.xlu0 %v448, 32
      %v707 = vpop.permute.xlu0 %706
      %708 = vrot.lane.b32.xlu0 %v449, 32
      %v709 = vpop.permute.xlu0 %708
      %710 = vrot.lane.b32.xlu0 %v450, 32
      %v711 = vpop.permute.xlu0 %710
      %v712 = vsel %vm460, %v707, 0
      %v714 = vsel %vm460, %v709, 0
      %v716 = vsel %vm460, %v711, 0
      %718 = vmatpush.msra.mxu0 0.0
      %719 = vmatpush.msra.mxu0 0.0
      %720 = vmatpush.msra.mxu0 0.0
      %721 = vmatpush.msra.mxu0 0.0
      %722 = vmatpush.msra.mxu0 0.0
      %723 = vmatpush.msra.mxu0 0.0
      %724 = vmatpush.msra.mxu0 0.0
      %725 = vmatpush.msra.mxu0 0.0
      %726 = vmatpush.msra.mxu0 0.0
      %727 = vmatpush.msra.mxu0 0.0
      %728 = vmatpush.msra.mxu0 0.0
      %729 = vmatpush.msra.mxu0 0.0
      %730 = vmatpush.msra.mxu0 0.0
      %731 = vmatpush.msra.mxu0 %v469
      %732 = vmatpush.msra.mxu0 %v443
      %733 = vmatpush.msra.mxu0 %v442
      %734 = vmatmul.f32.gmra.mxu0 %v712
      %v735 = vpop.f32.mrf.mxu0
      %v736 = vadd.f32 0.0, %v735
      %737 = vmatmul.f32.gmra.mxu0 %v714
      %v738 = vpop.f32.mrf.mxu0
      %v739 = vadd.f32 0.0, %v738
      %740 = vmatmul.f32.gmra.mxu0 %v716
      %v741 = vpop.f32.mrf.mxu0
      %v742 = vadd.f32 0.0, %v741
      %743 = vdwg.mxu0
      %744 = vmatpush.msra.mxu0 0.0
      %745 = vmatpush.msra.mxu0 0.0
      %746 = vmatpush.msra.mxu0 0.0
      %747 = vmatpush.msra.mxu0 0.0
      %748 = vmatpush.msra.mxu0 0.0
      %749 = vmatpush.msra.mxu0 0.0
      %750 = vmatpush.msra.mxu0 0.0
      %751 = vmatpush.msra.mxu0 0.0
      %752 = vmatpush.msra.mxu0 0.0
      %753 = vmatpush.msra.mxu0 0.0
      %754 = vmatpush.msra.mxu0 0.0
      %755 = vmatpush.msra.mxu0 0.0
      %756 = vmatpush.msra.mxu0 0.0
      %757 = vmatpush.msra.mxu0 %v472
      %758 = vmatpush.msra.mxu0 %v440
      %759 = vmatpush.msra.mxu0 %v439
      %760 = vmatmul.f32.gmra.mxu0 %v712
      %v761 = vpop.f32.mrf.mxu0
      %v762 = vadd.f32 0.0, %v761
      %763 = vmatmul.f32.gmra.mxu0 %v714
      %v764 = vpop.f32.mrf.mxu0
      %v765 = vadd.f32 0.0, %v764
      %766 = vmatmul.f32.gmra.mxu0 %v716
      %v767 = vpop.f32.mrf.mxu0
      %v768 = vadd.f32 0.0, %v767
      %769 = vdwg.mxu0
      %770 = vmatpush.msra.mxu0 0.0
      %771 = vmatpush.msra.mxu0 0.0
      %772 = vmatpush.msra.mxu0 0.0
      %773 = vmatpush.msra.mxu0 0.0
      %774 = vmatpush.msra.mxu0 0.0
      %775 = vmatpush.msra.mxu0 0.0
      %776 = vmatpush.msra.mxu0 0.0
      %777 = vmatpush.msra.mxu0 0.0
      %778 = vmatpush.msra.mxu0 0.0
      %779 = vmatpush.msra.mxu0 0.0
      %780 = vmatpush.msra.mxu0 0.0
      %781 = vmatpush.msra.mxu0 0.0
      %782 = vmatpush.msra.mxu0 0.0
      %783 = vmatpush.msra.mxu0 %v475
      %784 = vmatpush.msra.mxu0 %v437
      %785 = vmatpush.msra.mxu0 %v436
      %786 = vmatmul.f32.gmra.mxu0 %v712
      %v787 = vpop.f32.mrf.mxu0
      %v788 = vadd.f32 0.0, %v787
      %789 = vmatmul.f32.gmra.mxu0 %v714
      %v790 = vpop.f32.mrf.mxu0
      %v791 = vadd.f32 0.0, %v790
      %792 = vmatmul.f32.gmra.mxu0 %v716
      %v793 = vpop.f32.mrf.mxu0
      %v794 = vadd.f32 0.0, %v793
      %795 = vdwg.mxu0
      %796 = vmatpush.msra.mxu0 0.0
      %797 = vmatpush.msra.mxu0 0.0
      %798 = vmatpush.msra.mxu0 0.0
      %799 = vmatpush.msra.mxu0 0.0
      %800 = vmatpush.msra.mxu0 0.0
      %801 = vmatpush.msra.mxu0 0.0
      %802 = vmatpush.msra.mxu0 0.0
      %803 = vmatpush.msra.mxu0 0.0
      %804 = vmatpush.msra.mxu0 0.0
      %805 = vmatpush.msra.mxu0 0.0
      %806 = vmatpush.msra.mxu0 0.0
      %807 = vmatpush.msra.mxu0 0.0
      %808 = vmatpush.msra.mxu0 0.0
      %809 = vmatpush.msra.mxu0 %v478
      %810 = vmatpush.msra.mxu0 %v446
      %811 = vmatpush.msra.mxu0 %v445
      %812 = vmatmul.f32.gmra.mxu0 %v712
      %v813 = vpop.f32.mrf.mxu0
      %v814 = vadd.f32 0.0, %v813
      %815 = vmatmul.f32.gmra.mxu0 %v714
      %v816 = vpop.f32.mrf.mxu0
      %v817 = vadd.f32 0.0, %v816
      %818 = vmatmul.f32.gmra.mxu0 %v716
      %v819 = vpop.f32.mrf.mxu0
      %v820 = vadd.f32 0.0, %v819
      %821 = vdwg.mxu0
      %822 = vrot.lane.b32.xlu0 %v448, 64
      %v823 = vpop.permute.xlu0 %822
      %824 = vrot.lane.b32.xlu0 %v449, 64
      %v825 = vpop.permute.xlu0 %824
      %826 = vrot.lane.b32.xlu0 %v450, 64
      %v827 = vpop.permute.xlu0 %826
      %v828 = vsel %vm460, %v823, 0
      %v830 = vsel %vm460, %v825, 0
      %v832 = vsel %vm460, %v827, 0
      %834 = vmatpush.msra.mxu0 0.0
      %835 = vmatpush.msra.mxu0 0.0
      %836 = vmatpush.msra.mxu0 0.0
      %837 = vmatpush.msra.mxu0 0.0
      %838 = vmatpush.msra.mxu0 0.0
      %839 = vmatpush.msra.mxu0 0.0
      %840 = vmatpush.msra.mxu0 0.0
      %841 = vmatpush.msra.mxu0 0.0
      %842 = vmatpush.msra.mxu0 0.0
      %843 = vmatpush.msra.mxu0 0.0
      %844 = vmatpush.msra.mxu0 0.0
      %845 = vmatpush.msra.mxu0 0.0
      %846 = vmatpush.msra.mxu0 0.0
      %847 = vmatpush.msra.mxu0 %v591
      %848 = vmatpush.msra.mxu0 %v404
      %849 = vmatpush.msra.mxu0 %v400
      %850 = vmatmul.f32.gmra.mxu0 %v828
      %v851 = vpop.f32.mrf.mxu0
      %v852 = vadd.f32 %v736, %v851
      %853 = vmatmul.f32.gmra.mxu0 %v830
      %v854 = vpop.f32.mrf.mxu0
      %v855 = vadd.f32 %v739, %v854
      %856 = vmatmul.f32.gmra.mxu0 %v832
      %v857 = vpop.f32.mrf.mxu0
      %v858 = vadd.f32 %v742, %v857
      %859 = vdwg.mxu0
      %860 = vmatpush.msra.mxu0 0.0
      %861 = vmatpush.msra.mxu0 0.0
      %862 = vmatpush.msra.mxu0 0.0
      %863 = vmatpush.msra.mxu0 0.0
      %864 = vmatpush.msra.mxu0 0.0
      %865 = vmatpush.msra.mxu0 0.0
      %866 = vmatpush.msra.mxu0 0.0
      %867 = vmatpush.msra.mxu0 0.0
      %868 = vmatpush.msra.mxu0 0.0
      %869 = vmatpush.msra.mxu0 0.0
      %870 = vmatpush.msra.mxu0 0.0
      %871 = vmatpush.msra.mxu0 0.0
      %872 = vmatpush.msra.mxu0 0.0
      %873 = vmatpush.msra.mxu0 %v594
      %874 = vmatpush.msra.mxu0 %v405
      %875 = vmatpush.msra.mxu0 %v401
      %876 = vmatmul.f32.gmra.mxu0 %v828
      %v877 = vpop.f32.mrf.mxu0
      %v878 = vadd.f32 %v762, %v877
      %879 = vmatmul.f32.gmra.mxu0 %v830
      %v880 = vpop.f32.mrf.mxu0
      %v881 = vadd.f32 %v765, %v880
      %882 = vmatmul.f32.gmra.mxu0 %v832
      %v883 = vpop.f32.mrf.mxu0
      %v884 = vadd.f32 %v768, %v883
      %885 = vdwg.mxu0
      %886 = vmatpush.msra.mxu0 0.0
      %887 = vmatpush.msra.mxu0 0.0
      %888 = vmatpush.msra.mxu0 0.0
      %889 = vmatpush.msra.mxu0 0.0
      %890 = vmatpush.msra.mxu0 0.0
      %891 = vmatpush.msra.mxu0 0.0
      %892 = vmatpush.msra.mxu0 0.0
      %893 = vmatpush.msra.mxu0 0.0
      %894 = vmatpush.msra.mxu0 0.0
      %895 = vmatpush.msra.mxu0 0.0
      %896 = vmatpush.msra.mxu0 0.0
      %897 = vmatpush.msra.mxu0 0.0
      %898 = vmatpush.msra.mxu0 0.0
      %899 = vmatpush.msra.mxu0 %v597
      %900 = vmatpush.msra.mxu0 %v406
      %901 = vmatpush.msra.mxu0 %v402
      %902 = vmatmul.f32.gmra.mxu0 %v828
      %v903 = vpop.f32.mrf.mxu0
      %v904 = vadd.f32 %v788, %v903
      %905 = vmatmul.f32.gmra.mxu0 %v830
      %v906 = vpop.f32.mrf.mxu0
      %v907 = vadd.f32 %v791, %v906
      %908 = vmatmul.f32.gmra.mxu0 %v832
      %v909 = vpop.f32.mrf.mxu0
      %v910 = vadd.f32 %v794, %v909
      %911 = vdwg.mxu0
      %912 = vmatpush.msra.mxu0 0.0
      %913 = vmatpush.msra.mxu0 0.0
      %914 = vmatpush.msra.mxu0 0.0
      %915 = vmatpush.msra.mxu0 0.0
      %916 = vmatpush.msra.mxu0 0.0
      %917 = vmatpush.msra.mxu0 0.0
      %918 = vmatpush.msra.mxu0 0.0
      %919 = vmatpush.msra.mxu0 0.0
      %920 = vmatpush.msra.mxu0 0.0
      %921 = vmatpush.msra.mxu0 0.0
      %922 = vmatpush.msra.mxu0 0.0
      %923 = vmatpush.msra.mxu0 0.0
      %924 = vmatpush.msra.mxu0 0.0
      %925 = vmatpush.msra.mxu0 %v600
      %926 = vmatpush.msra.mxu0 %v407
      %927 = vmatpush.msra.mxu0 %v403
      %928 = vmatmul.f32.gmra.mxu0 %v828
      %v929 = vpop.f32.mrf.mxu0
      %v930 = vadd.f32 %v814, %v929
      %931 = vmatmul.f32.gmra.mxu0 %v830
      %v932 = vpop.f32.mrf.mxu0
      %v933 = vadd.f32 %v817, %v932
      %934 = vmatmul.f32.gmra.mxu0 %v832
      %v935 = vpop.f32.mrf.mxu0
      %v936 = vadd.f32 %v820, %v935
      %937 = vdwg.mxu0
      %938 = vrot.lane.b32.xlu0 %v852, 108
      %v939 = vpop.permute.xlu0 %938
      %940 = vrot.lane.b32.xlu0 %v855, 108
      %v941 = vpop.permute.xlu0 %940
      %942 = vrot.lane.b32.xlu0 %v858, 108
      %v943 = vpop.permute.xlu0 %942
      %944 = vrot.lane.b32.xlu0 %v878, 108
      %v945 = vpop.permute.xlu0 %944
      %946 = vrot.lane.b32.xlu0 %v881, 108
      %v947 = vpop.permute.xlu0 %946
      %948 = vrot.lane.b32.xlu0 %v884, 108
      %v949 = vpop.permute.xlu0 %948
      %950 = vrot.lane.b32.xlu0 %v904, 108
      %v951 = vpop.permute.xlu0 %950
      %952 = vrot.lane.b32.xlu0 %v907, 108
      %v953 = vpop.permute.xlu0 %952
      %954 = vrot.lane.b32.xlu0 %v910, 108
      %v955 = vpop.permute.xlu0 %954
      %956 = vrot.lane.b32.xlu0 %v930, 108
      %v957 = vpop.permute.xlu0 %956
      %958 = vrot.lane.b32.xlu0 %v933, 108
      %v959 = vpop.permute.xlu0 %958
      %960 = vrot.lane.b32.xlu0 %v936, 108
      %v961 = vpop.permute.xlu0 %960
      %v962 = vsel %vm348, %v951, %v957
      %v963 = vsel %vm348, %v953, %v959
      %v964 = vsel %vm348, %v955, %v961
      %v965 = vsel %vm348, %v945, %v951
      %v966 = vsel %vm348, %v947, %v953
      %v967 = vsel %vm348, %v949, %v955
      %v968 = vsel %vm348, %v939, %v945
      %v969 = vsel %vm348, %v941, %v947
      %v970 = vsel %vm348, %v943, %v949
      %v971 = vsel %vm348, %v957, %v939
      %v972 = vsel %vm348, %v959, %v941
      %v973 = vsel %vm348, %v961, %v943
      %v974 = vadd.f32 %v620, %v968
      %v975 = vadd.f32 %v646, %v965
      %v976 = vadd.f32 %v672, %v962
      %v977 = vadd.f32 %v698, %v971
      %v978 = vadd.f32 %v623, %v969
      %v979 = vadd.f32 %v649, %v966
      %v980 = vadd.f32 %v675, %v963
      %v981 = vadd.f32 %v701, %v972
      %v982 = vadd.f32 %v626, %v970
      %v983 = vadd.f32 %v652, %v967
      %v984 = vadd.f32 %v678, %v964
      %v985 = vadd.f32 %v704, %v973
      %986 = vset.pattern.permute.xlu0 1
      %987 = vperm.xlu0 %986, %v321
      %v988 = vpop.permute.xlu0 %987
      %990 = vset.pattern.permute.xlu0 1
      %991 = vperm.xlu0 %990, %v322
      %v992 = vpop.permute.xlu0 %991
      %994 = vset.pattern.permute.xlu0 1
      %995 = vperm.xlu0 %994, %v323
      %v996 = vpop.permute.xlu0 %995
      %v998 = vadd.f32 %v974, %v988
      %v999 = vadd.f32 %v975, %v988
      %v1000 = vadd.f32 %v976, %v988
      %v1001 = vadd.f32 %v977, %v988
      %v1002 = vadd.f32 %v978, %v992
      %v1003 = vadd.f32 %v979, %v992
      %v1004 = vadd.f32 %v980, %v992
      %v1005 = vadd.f32 %v981, %v992
      %v1006 = vadd.f32 %v982, %v996
      %v1007 = vadd.f32 %v983, %v996
      %v1008 = vadd.f32 %v984, %v996
      %v1009 = vadd.f32 %v985, %v996
      %v1010 = vmax.f32 %v998, 0.0
      %v1011 = vmax.f32 %v999, 0.0
      %v1012 = vmax.f32 %v1000, 0.0
      %v1013 = vmax.f32 %v1001, 0.0
      %v1014 = vmax.f32 %v1002, 0.0
      %v1015 = vmax.f32 %v1003, 0.0
      %v1016 = vmax.f32 %v1004, 0.0
      %v1017 = vmax.f32 %v1005, 0.0
      %v1018 = vmax.f32 %v1006, 0.0
      %v1019 = vmax.f32 %v1007, 0.0
      %v1020 = vmax.f32 %v1008, 0.0
      %v1021 = vmax.f32 %v1009, 0.0
      %1022 = vrot.lane.b32.xlu0 %v1010, 127
      %v1023 = vpop.permute.xlu0 %1022
      %1024 = vrot.lane.b32.xlu0 %v1014, 127
      %v1025 = vpop.permute.xlu0 %1024
      %1026 = vrot.lane.b32.xlu0 %v1018, 127
      %v1027 = vpop.permute.xlu0 %1026
      %1028 = vrot.lane.b32.xlu0 %v1011, 127
      %v1029 = vpop.permute.xlu0 %1028
      %1030 = vrot.lane.b32.xlu0 %v1015, 127
      %v1031 = vpop.permute.xlu0 %1030
      %1032 = vrot.lane.b32.xlu0 %v1019, 127
      %v1033 = vpop.permute.xlu0 %1032
      %1034 = vrot.lane.b32.xlu0 %v1012, 127
      %v1035 = vpop.permute.xlu0 %1034
      %1036 = vrot.lane.b32.xlu0 %v1016, 127
      %v1037 = vpop.permute.xlu0 %1036
      %1038 = vrot.lane.b32.xlu0 %v1020, 127
      %v1039 = vpop.permute.xlu0 %1038
      %1040 = vrot.lane.b32.xlu0 %v1013, 127
      %v1041 = vpop.permute.xlu0 %1040
      %1042 = vrot.lane.b32.xlu0 %v1017, 127
      %v1043 = vpop.permute.xlu0 %1042
      %1044 = vrot.lane.b32.xlu0 %v1021, 127
      %v1045 = vpop.permute.xlu0 %1044
      %v1046 = vsel %vm186, %v1035, %v1041
      %v1047 = vsel %vm186, %v1037, %v1043
      %v1048 = vsel %vm186, %v1039, %v1045
      %v1049 = vsel %vm186, %v1029, %v1035
      %v1050 = vsel %vm186, %v1031, %v1037
      %v1051 = vsel %vm186, %v1033, %v1039
      %v1052 = vsel %vm186, %v1023, %v1029
      %v1053 = vsel %vm186, %v1025, %v1031
      %v1054 = vsel %vm186, %v1027, %v1033
      %v1055 = vsel %vm186, %v1041, %v1023
      %v1056 = vsel %vm186, %v1043, %v1025
      %v1057 = vsel %vm186, %v1045, %v1027
      %v1058 = vmax.f32 %v1010, %v1052
      %v1059 = vmax.f32 %v1011, %v1049
      %v1060 = vmax.f32 %v1012, %v1046
      %v1061 = vmax.f32 %v1013, %v1055
      %v1062 = vmax.f32 %v1014, %v1053
      %v1063 = vmax.f32 %v1015, %v1050
      %v1064 = vmax.f32 %v1016, %v1047
      %v1065 = vmax.f32 %v1017, %v1056
      %v1066 = vmax.f32 %v1018, %v1054
      %v1067 = vmax.f32 %v1019, %v1051
      %v1068 = vmax.f32 %v1020, %v1048
      %v1069 = vmax.f32 %v1021, %v1057
      %1070 = vrot.lane.b32.xlu0 %v1058, 108
      %v1071 = vpop.permute.xlu0 %1070
      %1072 = vrot.lane.b32.xlu0 %v1062, 108
      %v1073 = vpop.permute.xlu0 %1072
      %1074 = vrot.lane.b32.xlu0 %v1066, 108
      %v1075 = vpop.permute.xlu0 %1074
      %1076 = vrot.lane.b32.xlu0 %v1059, 108
      %v1077 = vpop.permute.xlu0 %1076
      %1078 = vrot.lane.b32.xlu0 %v1063, 108
      %v1079 = vpop.permute.xlu0 %1078
      %1080 = vrot.lane.b32.xlu0 %v1067, 108
      %v1081 = vpop.permute.xlu0 %1080
      %1082 = vrot.lane.b32.xlu0 %v1060, 108
      %v1083 = vpop.permute.xlu0 %1082
      %1084 = vrot.lane.b32.xlu0 %v1064, 108
      %v1085 = vpop.permute.xlu0 %1084
      %1086 = vrot.lane.b32.xlu0 %v1068, 108
      %v1087 = vpop.permute.xlu0 %1086
      %1088 = vrot.lane.b32.xlu0 %v1061, 108
      %v1089 = vpop.permute.xlu0 %1088
      %1090 = vrot.lane.b32.xlu0 %v1065, 108
      %v1091 = vpop.permute.xlu0 %1090
      %1092 = vrot.lane.b32.xlu0 %v1069, 108
      %v1093 = vpop.permute.xlu0 %1092
      %v1094 = vsel %vm348, %v1083, %v1089
      %v1095 = vsel %vm348, %v1085, %v1091
      %v1096 = vsel %vm348, %v1087, %v1093
      %v1097 = vsel %vm348, %v1077, %v1083
      %v1098 = vsel %vm348, %v1079, %v1085
      %v1099 = vsel %vm348, %v1081, %v1087
      %v1100 = vsel %vm348, %v1071, %v1077
      %v1101 = vsel %vm348, %v1073, %v1079
      %v1102 = vsel %vm348, %v1075, %v1081
      %v1103 = vsel %vm348, %v1089, %v1071
      %v1104 = vsel %vm348, %v1091, %v1073
      %v1105 = vsel %vm348, %v1093, %v1075
      %v1106 = vmax.f32 %v1058, %v1100
      %v1107 = vmax.f32 %v1059, %v1097
      %v1108 = vmax.f32 %v1060, %v1094
      %v1109 = vmax.f32 %v1061, %v1103
      %v1110 = vmax.f32 %v1062, %v1101
      %v1111 = vmax.f32 %v1063, %v1098
      %v1112 = vmax.f32 %v1064, %v1095
      %v1113 = vmax.f32 %v1065, %v1104
      %v1114 = vmax.f32 %v1066, %v1102
      %v1115 = vmax.f32 %v1067, %v1099
      %v1116 = vmax.f32 %v1068, %v1096
      %v1117 = vmax.f32 %v1069, %v1105
      %1118 = vrot.lane.b32.xlu0 %v1106, 126
      %v1119 = vpop.permute.xlu0 %1118
      %1120 = vrot.lane.b32.xlu0 %v1110, 126
      %v1121 = vpop.permute.xlu0 %1120
      %1122 = vrot.lane.b32.xlu0 %v1114, 126
      %v1123 = vpop.permute.xlu0 %1122
      %1124 = vrot.lane.b32.xlu0 %v1107, 126
      %v1125 = vpop.permute.xlu0 %1124
      %1126 = vrot.lane.b32.xlu0 %v1111, 126
      %v1127 = vpop.permute.xlu0 %1126
      %1128 = vrot.lane.b32.xlu0 %v1115, 126
      %v1129 = vpop.permute.xlu0 %1128
      %1130 = vrot.lane.b32.xlu0 %v1108, 126
      %v1131 = vpop.permute.xlu0 %1130
      %1132 = vrot.lane.b32.xlu0 %v1112, 126
      %v1133 = vpop.permute.xlu0 %1132
      %1134 = vrot.lane.b32.xlu0 %v1116, 126
      %v1135 = vpop.permute.xlu0 %1134
      %1136 = vrot.lane.b32.xlu0 %v1109, 126
      %v1137 = vpop.permute.xlu0 %1136
      %1138 = vrot.lane.b32.xlu0 %v1113, 126
      %v1139 = vpop.permute.xlu0 %1138
      %1140 = vrot.lane.b32.xlu0 %v1117, 126
      %v1141 = vpop.permute.xlu0 %1140
      %vm1142 = vcmp.lt.s32.totalorder %v185, 126
      %v1143 = vsel %vm1142, %v1131, %v1137
      %v1144 = vsel %vm1142, %v1133, %v1139
      %v1145 = vsel %vm1142, %v1135, %v1141
      %v1146 = vsel %vm1142, %v1125, %v1131
      %v1147 = vsel %vm1142, %v1127, %v1133
      %v1148 = vsel %vm1142, %v1129, %v1135
      %v1149 = vsel %vm1142, %v1119, %v1125
      %v1150 = vsel %vm1142, %v1121, %v1127
      %v1151 = vsel %vm1142, %v1123, %v1129
      %v1152 = vsel %vm1142, %v1137, %v1119
      %v1153 = vsel %vm1142, %v1139, %v1121
      %v1154 = vsel %vm1142, %v1141, %v1123
      %v1155 = vld [vmem:[%s1 + $0x30] sm:$0xff]
      %v1156 = vld [vmem:[%s1 + $0x38] sm:$0xff]
      %v1157 = vld [vmem:[%s1 + $0x40] sm:$0xf]
      %1161 = vrot.lane.b32.xlu0 %v1155, 96
      %v1162 = vpop.permute.xlu0 %1161
      %1163 = vrot.lane.b32.xlu0 %v1156, 96
      %v1164 = vpop.permute.xlu0 %1163
      %1165 = vrot.lane.b32.xlu0 %v1157, 96
      %v1166 = vpop.permute.xlu0 %1165
      %v1167 = vsel %vm460, %v1162, 0
      %v1169 = vsel %vm460, %v1164, 0
      %v1171 = vsel %vm460, %v1166, 0
      %v1174 = vsel %vm467, %v1151, 0
      %v1177 = vsel %vm467, %v1148, 0
      %v1180 = vsel %vm467, %v1145, 0
      %v1183 = vsel %vm467, %v1154, 0
      %1185 = vmatpush.msra.mxu0 0.0
      %1186 = vmatpush.msra.mxu0 0.0
      %1187 = vmatpush.msra.mxu0 0.0
      %1188 = vmatpush.msra.mxu0 0.0
      %1189 = vmatpush.msra.mxu0 0.0
      %1190 = vmatpush.msra.mxu0 0.0
      %1191 = vmatpush.msra.mxu0 0.0
      %1192 = vmatpush.msra.mxu0 0.0
      %1193 = vmatpush.msra.mxu0 0.0
      %1194 = vmatpush.msra.mxu0 0.0
      %1195 = vmatpush.msra.mxu0 0.0
      %1196 = vmatpush.msra.mxu0 0.0
      %1197 = vmatpush.msra.mxu0 0.0
      %1198 = vmatpush.msra.mxu0 %v1174
      %1199 = vmatpush.msra.mxu0 %v1150
      %1200 = vmatpush.msra.mxu0 %v1149
      %1201 = vmatmul.f32.gmra.mxu0 %v1167
      %v1202 = vpop.f32.mrf.mxu0
      %v1203 = vadd.f32 0.0, %v1202
      %1204 = vmatmul.f32.gmra.mxu0 %v1169
      %v1205 = vpop.f32.mrf.mxu0
      %v1206 = vadd.f32 0.0, %v1205
      %1207 = vmatmul.f32.gmra.mxu0 %v1171
      %v1208 = vpop.f32.mrf.mxu0
      %v1209 = vadd.f32 0.0, %v1208
      %1210 = vdwg.mxu0
      %1211 = vmatpush.msra.mxu0 0.0
      %1212 = vmatpush.msra.mxu0 0.0
      %1213 = vmatpush.msra.mxu0 0.0
      %1214 = vmatpush.msra.mxu0 0.0
      %1215 = vmatpush.msra.mxu0 0.0
      %1216 = vmatpush.msra.mxu0 0.0
      %1217 = vmatpush.msra.mxu0 0.0
      %1218 = vmatpush.msra.mxu0 0.0
      %1219 = vmatpush.msra.mxu0 0.0
      %1220 = vmatpush.msra.mxu0 0.0
      %1221 = vmatpush.msra.mxu0 0.0
      %1222 = vmatpush.msra.mxu0 0.0
      %1223 = vmatpush.msra.mxu0 0.0
      %1224 = vmatpush.msra.mxu0 %v1177
      %1225 = vmatpush.msra.mxu0 %v1147
      %1226 = vmatpush.msra.mxu0 %v1146
      %1227 = vmatmul.f32.gmra.mxu0 %v1167
      %v1228 = vpop.f32.mrf.mxu0
      %v1229 = vadd.f32 0.0, %v1228
      %1230 = vmatmul.f32.gmra.mxu0 %v1169
      %v1231 = vpop.f32.mrf.mxu0
      %v1232 = vadd.f32 0.0, %v1231
      %1233 = vmatmul.f32.gmra.mxu0 %v1171
      %v1234 = vpop.f32.mrf.mxu0
      %v1235 = vadd.f32 0.0, %v1234
      %1236 = vdwg.mxu0
      %1237 = vmatpush.msra.mxu0 0.0
      %1238 = vmatpush.msra.mxu0 0.0
      %1239 = vmatpush.msra.mxu0 0.0
      %1240 = vmatpush.msra.mxu0 0.0
      %1241 = vmatpush.msra.mxu0 0.0
      %1242 = vmatpush.msra.mxu0 0.0
      %1243 = vmatpush.msra.mxu0 0.0
      %1244 = vmatpush.msra.mxu0 0.0
      %1245 = vmatpush.msra.mxu0 0.0
      %1246 = vmatpush.msra.mxu0 0.0
      %1247 = vmatpush.msra.mxu0 0.0
      %1248 = vmatpush.msra.mxu0 0.0
      %1249 = vmatpush.msra.mxu0 0.0
      %1250 = vmatpush.msra.mxu0 %v1180
      %1251 = vmatpush.msra.mxu0 %v1144
      %1252 = vmatpush.msra.mxu0 %v1143
      %1253 = vmatmul.f32.gmra.mxu0 %v1167
      %v1254 = vpop.f32.mrf.mxu0
      %v1255 = vadd.f32 0.0, %v1254
      %1256 = vmatmul.f32.gmra.mxu0 %v1169
      %v1257 = vpop.f32.mrf.mxu0
      %v1258 = vadd.f32 0.0, %v1257
      %1259 = vmatmul.f32.gmra.mxu0 %v1171
      %v1260 = vpop.f32.mrf.mxu0
      %v1261 = vadd.f32 0.0, %v1260
      %1262 = vdwg.mxu0
      %1263 = vmatpush.msra.mxu0 0.0
      %1264 = vmatpush.msra.mxu0 0.0
      %1265 = vmatpush.msra.mxu0 0.0
      %1266 = vmatpush.msra.mxu0 0.0
      %1267 = vmatpush.msra.mxu0 0.0
      %1268 = vmatpush.msra.mxu0 0.0
      %1269 = vmatpush.msra.mxu0 0.0
      %1270 = vmatpush.msra.mxu0 0.0
      %1271 = vmatpush.msra.mxu0 0.0
      %1272 = vmatpush.msra.mxu0 0.0
      %1273 = vmatpush.msra.mxu0 0.0
      %1274 = vmatpush.msra.mxu0 0.0
      %1275 = vmatpush.msra.mxu0 0.0
      %1276 = vmatpush.msra.mxu0 %v1183
      %1277 = vmatpush.msra.mxu0 %v1153
      %1278 = vmatpush.msra.mxu0 %v1152
      %1279 = vmatmul.f32.gmra.mxu0 %v1167
      %v1280 = vpop.f32.mrf.mxu0
      %v1281 = vadd.f32 0.0, %v1280
      %1282 = vmatmul.f32.gmra.mxu0 %v1169
      %v1283 = vpop.f32.mrf.mxu0
      %v1284 = vadd.f32 0.0, %v1283
      %1285 = vmatmul.f32.gmra.mxu0 %v1171
      %v1286 = vpop.f32.mrf.mxu0
      %v1287 = vadd.f32 0.0, %v1286
      %1288 = vdwg.mxu0
      %v1289 = vsel %vm460, %v1155, 0
      %v1291 = vsel %vm460, %v1156, 0
      %v1293 = vsel %vm460, %v1157, 0
      %v1296 = vsel %vm467, %v1114, 0
      %v1299 = vsel %vm467, %v1115, 0
      %v1302 = vsel %vm467, %v1116, 0
      %v1305 = vsel %vm467, %v1117, 0
      %1307 = vmatpush.msra.mxu0 0.0
      %1308 = vmatpush.msra.mxu0 0.0
      %1309 = vmatpush.msra.mxu0 0.0
      %1310 = vmatpush.msra.mxu0 0.0
      %1311 = vmatpush.msra.mxu0 0.0
      %1312 = vmatpush.msra.mxu0 0.0
      %1313 = vmatpush.msra.mxu0 0.0
      %1314 = vmatpush.msra.mxu0 0.0
      %1315 = vmatpush.msra.mxu0 0.0
      %1316 = vmatpush.msra.mxu0 0.0
      %1317 = vmatpush.msra.mxu0 0.0
      %1318 = vmatpush.msra.mxu0 0.0
      %1319 = vmatpush.msra.mxu0 0.0
      %1320 = vmatpush.msra.mxu0 %v1296
      %1321 = vmatpush.msra.mxu0 %v1110
      %1322 = vmatpush.msra.mxu0 %v1106
      %1323 = vmatmul.f32.gmra.mxu0 %v1289
      %v1324 = vpop.f32.mrf.mxu0
      %v1325 = vadd.f32 %v1203, %v1324
      %1326 = vmatmul.f32.gmra.mxu0 %v1291
      %v1327 = vpop.f32.mrf.mxu0
      %v1328 = vadd.f32 %v1206, %v1327
      %1329 = vmatmul.f32.gmra.mxu0 %v1293
      %v1330 = vpop.f32.mrf.mxu0
      %v1331 = vadd.f32 %v1209, %v1330
      %1332 = vdwg.mxu0
      %1333 = vmatpush.msra.mxu0 0.0
      %1334 = vmatpush.msra.mxu0 0.0
      %1335 = vmatpush.msra.mxu0 0.0
      %1336 = vmatpush.msra.mxu0 0.0
      %1337 = vmatpush.msra.mxu0 0.0
      %1338 = vmatpush.msra.mxu0 0.0
      %1339 = vmatpush.msra.mxu0 0.0
      %1340 = vmatpush.msra.mxu0 0.0
      %1341 = vmatpush.msra.mxu0 0.0
      %1342 = vmatpush.msra.mxu0 0.0
      %1343 = vmatpush.msra.mxu0 0.0
      %1344 = vmatpush.msra.mxu0 0.0
      %1345 = vmatpush.msra.mxu0 0.0
      %1346 = vmatpush.msra.mxu0 %v1299
      %1347 = vmatpush.msra.mxu0 %v1111
      %1348 = vmatpush.msra.mxu0 %v1107
      %1349 = vmatmul.f32.gmra.mxu0 %v1289
      %v1350 = vpop.f32.mrf.mxu0
      %v1351 = vadd.f32 %v1229, %v1350
      %1352 = vmatmul.f32.gmra.mxu0 %v1291
      %v1353 = vpop.f32.mrf.mxu0
      %v1354 = vadd.f32 %v1232, %v1353
      %1355 = vmatmul.f32.gmra.mxu0 %v1293
      %v1356 = vpop.f32.mrf.mxu0
      %v1357 = vadd.f32 %v1235, %v1356
      %1358 = vdwg.mxu0
      %1359 = vmatpush.msra.mxu0 0.0
      %1360 = vmatpush.msra.mxu0 0.0
      %1361 = vmatpush.msra.mxu0 0.0
      %1362 = vmatpush.msra.mxu0 0.0
      %1363 = vmatpush.msra.mxu0 0.0
      %1364 = vmatpush.msra.mxu0 0.0
      %1365 = vmatpush.msra.mxu0 0.0
      %1366 = vmatpush.msra.mxu0 0.0
      %1367 = vmatpush.msra.mxu0 0.0
      %1368 = vmatpush.msra.mxu0 0.0
      %1369 = vmatpush.msra.mxu0 0.0
      %1370 = vmatpush.msra.mxu0 0.0
      %1371 = vmatpush.msra.mxu0 0.0
      %1372 = vmatpush.msra.mxu0 %v1302
      %1373 = vmatpush.msra.mxu0 %v1112
      %1374 = vmatpush.msra.mxu0 %v1108
      %1375 = vmatmul.f32.gmra.mxu0 %v1289
      %v1376 = vpop.f32.mrf.mxu0
      %v1377 = vadd.f32 %v1255, %v1376
      %1378 = vmatmul.f32.gmra.mxu0 %v1291
      %v1379 = vpop.f32.mrf.mxu0
      %v1380 = vadd.f32 %v1258, %v1379
      %1381 = vmatmul.f32.gmra.mxu0 %v1293
      %v1382 = vpop.f32.mrf.mxu0
      %v1383 = vadd.f32 %v1261, %v1382
      %1384 = vdwg.mxu0
      %1385 = vmatpush.msra.mxu0 0.0
      %1386 = vmatpush.msra.mxu0 0.0
      %1387 = vmatpush.msra.mxu0 0.0
      %1388 = vmatpush.msra.mxu0 0.0
      %1389 = vmatpush.msra.mxu0 0.0
      %1390 = vmatpush.msra.mxu0 0.0
      %1391 = vmatpush.msra.mxu0 0.0
      %1392 = vmatpush.msra.mxu0 0.0
      %1393 = vmatpush.msra.mxu0 0.0
      %1394 = vmatpush.msra.mxu0 0.0
      %1395 = vmatpush.msra.mxu0 0.0
      %1396 = vmatpush.msra.mxu0 0.0
      %1397 = vmatpush.msra.mxu0 0.0
      %1398 = vmatpush.msra.mxu0 %v1305
      %1399 = vmatpush.msra.mxu0 %v1113
      %1400 = vmatpush.msra.mxu0 %v1109
      %1401 = vmatmul.f32.gmra.mxu0 %v1289
      %v1402 = vpop.f32.mrf.mxu0
      %v1403 = vadd.f32 %v1281, %v1402
      %1404 = vmatmul.f32.gmra.mxu0 %v1291
      %v1405 = vpop.f32.mrf.mxu0
      %v1406 = vadd.f32 %v1284, %v1405
      %1407 = vmatmul.f32.gmra.mxu0 %v1293
      %v1408 = vpop.f32.mrf.mxu0
      %v1409 = vadd.f32 %v1287, %v1408
      %1410 = vdwg.mxu0
      %1411 = vrot.lane.b32.xlu0 %v1155, 32
      %v1412 = vpop.permute.xlu0 %1411
      %1413 = vrot.lane.b32.xlu0 %v1156, 32
      %v1414 = vpop.permute.xlu0 %1413
      %1415 = vrot.lane.b32.xlu0 %v1157, 32
      %v1416 = vpop.permute.xlu0 %1415
      %v1417 = vsel %vm460, %v1412, 0
      %v1419 = vsel %vm460, %v1414, 0
      %v1421 = vsel %vm460, %v1416, 0
      %1423 = vmatpush.msra.mxu0 0.0
      %1424 = vmatpush.msra.mxu0 0.0
      %1425 = vmatpush.msra.mxu0 0.0
      %1426 = vmatpush.msra.mxu0 0.0
      %1427 = vmatpush.msra.mxu0 0.0
      %1428 = vmatpush.msra.mxu0 0.0
      %1429 = vmatpush.msra.mxu0 0.0
      %1430 = vmatpush.msra.mxu0 0.0
      %1431 = vmatpush.msra.mxu0 0.0
      %1432 = vmatpush.msra.mxu0 0.0
      %1433 = vmatpush.msra.mxu0 0.0
      %1434 = vmatpush.msra.mxu0 0.0
      %1435 = vmatpush.msra.mxu0 0.0
      %1436 = vmatpush.msra.mxu0 %v1174
      %1437 = vmatpush.msra.mxu0 %v1150
      %1438 = vmatpush.msra.mxu0 %v1149
      %1439 = vmatmul.f32.gmra.mxu0 %v1417
      %v1440 = vpop.f32.mrf.mxu0
      %v1441 = vadd.f32 0.0, %v1440
      %1442 = vmatmul.f32.gmra.mxu0 %v1419
      %v1443 = vpop.f32.mrf.mxu0
      %v1444 = vadd.f32 0.0, %v1443
      %1445 = vmatmul.f32.gmra.mxu0 %v1421
      %v1446 = vpop.f32.mrf.mxu0
      %v1447 = vadd.f32 0.0, %v1446
      %1448 = vdwg.mxu0
      %1449 = vmatpush.msra.mxu0 0.0
      %1450 = vmatpush.msra.mxu0 0.0
      %1451 = vmatpush.msra.mxu0 0.0
      %1452 = vmatpush.msra.mxu0 0.0
      %1453 = vmatpush.msra.mxu0 0.0
      %1454 = vmatpush.msra.mxu0 0.0
      %1455 = vmatpush.msra.mxu0 0.0
      %1456 = vmatpush.msra.mxu0 0.0
      %1457 = vmatpush.msra.mxu0 0.0
      %1458 = vmatpush.msra.mxu0 0.0
      %1459 = vmatpush.msra.mxu0 0.0
      %1460 = vmatpush.msra.mxu0 0.0
      %1461 = vmatpush.msra.mxu0 0.0
      %1462 = vmatpush.msra.mxu0 %v1177
      %1463 = vmatpush.msra.mxu0 %v1147
      %1464 = vmatpush.msra.mxu0 %v1146
      %1465 = vmatmul.f32.gmra.mxu0 %v1417
      %v1466 = vpop.f32.mrf.mxu0
      %v1467 = vadd.f32 0.0, %v1466
      %1468 = vmatmul.f32.gmra.mxu0 %v1419
      %v1469 = vpop.f32.mrf.mxu0
      %v1470 = vadd.f32 0.0, %v1469
      %1471 = vmatmul.f32.gmra.mxu0 %v1421
      %v1472 = vpop.f32.mrf.mxu0
      %v1473 = vadd.f32 0.0, %v1472
      %1474 = vdwg.mxu0
      %1475 = vmatpush.msra.mxu0 0.0
      %1476 = vmatpush.msra.mxu0 0.0
      %1477 = vmatpush.msra.mxu0 0.0
      %1478 = vmatpush.msra.mxu0 0.0
      %1479 = vmatpush.msra.mxu0 0.0
      %1480 = vmatpush.msra.mxu0 0.0
      %1481 = vmatpush.msra.mxu0 0.0
      %1482 = vmatpush.msra.mxu0 0.0
      %1483 = vmatpush.msra.mxu0 0.0
      %1484 = vmatpush.msra.mxu0 0.0
      %1485 = vmatpush.msra.mxu0 0.0
      %1486 = vmatpush.msra.mxu0 0.0
      %1487 = vmatpush.msra.mxu0 0.0
      %1488 = vmatpush.msra.mxu0 %v1180
      %1489 = vmatpush.msra.mxu0 %v1144
      %1490 = vmatpush.msra.mxu0 %v1143
      %1491 = vmatmul.f32.gmra.mxu0 %v1417
      %v1492 = vpop.f32.mrf.mxu0
      %v1493 = vadd.f32 0.0, %v1492
      %1494 = vmatmul.f32.gmra.mxu0 %v1419
      %v1495 = vpop.f32.mrf.mxu0
      %v1496 = vadd.f32 0.0, %v1495
      %1497 = vmatmul.f32.gmra.mxu0 %v1421
      %v1498 = vpop.f32.mrf.mxu0
      %v1499 = vadd.f32 0.0, %v1498
      %1500 = vdwg.mxu0
      %1501 = vmatpush.msra.mxu0 0.0
      %1502 = vmatpush.msra.mxu0 0.0
      %1503 = vmatpush.msra.mxu0 0.0
      %1504 = vmatpush.msra.mxu0 0.0
      %1505 = vmatpush.msra.mxu0 0.0
      %1506 = vmatpush.msra.mxu0 0.0
      %1507 = vmatpush.msra.mxu0 0.0
      %1508 = vmatpush.msra.mxu0 0.0
      %1509 = vmatpush.msra.mxu0 0.0
      %1510 = vmatpush.msra.mxu0 0.0
      %1511 = vmatpush.msra.mxu0 0.0
      %1512 = vmatpush.msra.mxu0 0.0
      %1513 = vmatpush.msra.mxu0 0.0
      %1514 = vmatpush.msra.mxu0 %v1183
      %1515 = vmatpush.msra.mxu0 %v1153
      %1516 = vmatpush.msra.mxu0 %v1152
      %1517 = vmatmul.f32.gmra.mxu0 %v1417
      %v1518 = vpop.f32.mrf.mxu0
      %v1519 = vadd.f32 0.0, %v1518
      %1520 = vmatmul.f32.gmra.mxu0 %v1419
      %v1521 = vpop.f32.mrf.mxu0
      %v1522 = vadd.f32 0.0, %v1521
      %1523 = vmatmul.f32.gmra.mxu0 %v1421
      %v1524 = vpop.f32.mrf.mxu0
      %v1525 = vadd.f32 0.0, %v1524
      %1526 = vdwg.mxu0
      %1527 = vrot.lane.b32.xlu0 %v1155, 64
      %v1528 = vpop.permute.xlu0 %1527
      %1529 = vrot.lane.b32.xlu0 %v1156, 64
      %v1530 = vpop.permute.xlu0 %1529
      %1531 = vrot.lane.b32.xlu0 %v1157, 64
      %v1532 = vpop.permute.xlu0 %1531
      %v1533 = vsel %vm460, %v1528, 0
      %v1535 = vsel %vm460, %v1530, 0
      %v1537 = vsel %vm460, %v1532, 0
      %1539 = vmatpush.msra.mxu0 0.0
      %1540 = vmatpush.msra.mxu0 0.0
      %1541 = vmatpush.msra.mxu0 0.0
      %1542 = vmatpush.msra.mxu0 0.0
      %1543 = vmatpush.msra.mxu0 0.0
      %1544 = vmatpush.msra.mxu0 0.0
      %1545 = vmatpush.msra.mxu0 0.0
      %1546 = vmatpush.msra.mxu0 0.0
      %1547 = vmatpush.msra.mxu0 0.0
      %1548 = vmatpush.msra.mxu0 0.0
      %1549 = vmatpush.msra.mxu0 0.0
      %1550 = vmatpush.msra.mxu0 0.0
      %1551 = vmatpush.msra.mxu0 0.0
      %1552 = vmatpush.msra.mxu0 %v1296
      %1553 = vmatpush.msra.mxu0 %v1110
      %1554 = vmatpush.msra.mxu0 %v1106
      %1555 = vmatmul.f32.gmra.mxu0 %v1533
      %v1556 = vpop.f32.mrf.mxu0
      %v1557 = vadd.f32 %v1441, %v1556
      %1558 = vmatmul.f32.gmra.mxu0 %v1535
      %v1559 = vpop.f32.mrf.mxu0
      %v1560 = vadd.f32 %v1444, %v1559
      %1561 = vmatmul.f32.gmra.mxu0 %v1537
      %v1562 = vpop.f32.mrf.mxu0
      %v1563 = vadd.f32 %v1447, %v1562
      %1564 = vdwg.mxu0
      %1565 = vmatpush.msra.mxu0 0.0
      %1566 = vmatpush.msra.mxu0 0.0
      %1567 = vmatpush.msra.mxu0 0.0
      %1568 = vmatpush.msra.mxu0 0.0
      %1569 = vmatpush.msra.mxu0 0.0
      %1570 = vmatpush.msra.mxu0 0.0
      %1571 = vmatpush.msra.mxu0 0.0
      %1572 = vmatpush.msra.mxu0 0.0
      %1573 = vmatpush.msra.mxu0 0.0
      %1574 = vmatpush.msra.mxu0 0.0
      %1575 = vmatpush.msra.mxu0 0.0
      %1576 = vmatpush.msra.mxu0 0.0
      %1577 = vmatpush.msra.mxu0 0.0
      %1578 = vmatpush.msra.mxu0 %v1299
      %1579 = vmatpush.msra.mxu0 %v1111
      %1580 = vmatpush.msra.mxu0 %v1107
      %1581 = vmatmul.f32.gmra.mxu0 %v1533
      %v1582 = vpop.f32.mrf.mxu0
      %v1583 = vadd.f32 %v1467, %v1582
      %1584 = vmatmul.f32.gmra.mxu0 %v1535
      %v1585 = vpop.f32.mrf.mxu0
      %v1586 = vadd.f32 %v1470, %v1585
      %1587 = vmatmul.f32.gmra.mxu0 %v1537
      %v1588 = vpop.f32.mrf.mxu0
      %v1589 = vadd.f32 %v1473, %v1588
      %1590 = vdwg.mxu0
      %1591 = vmatpush.msra.mxu0 0.0
      %1592 = vmatpush.msra.mxu0 0.0
      %1593 = vmatpush.msra.mxu0 0.0
      %1594 = vmatpush.msra.mxu0 0.0
      %1595 = vmatpush.msra.mxu0 0.0
      %1596 = vmatpush.msra.mxu0 0.0
      %1597 = vmatpush.msra.mxu0 0.0
      %1598 = vmatpush.msra.mxu0 0.0
      %1599 = vmatpush.msra.mxu0 0.0
      %1600 = vmatpush.msra.mxu0 0.0
      %1601 = vmatpush.msra.mxu0 0.0
      %1602 = vmatpush.msra.mxu0 0.0
      %1603 = vmatpush.msra.mxu0 0.0
      %1604 = vmatpush.msra.mxu0 %v1302
      %1605 = vmatpush.msra.mxu0 %v1112
      %1606 = vmatpush.msra.mxu0 %v1108
      %1607 = vmatmul.f32.gmra.mxu0 %v1533
      %v1608 = vpop.f32.mrf.mxu0
      %v1609 = vadd.f32 %v1493, %v1608
      %1610 = vmatmul.f32.gmra.mxu0 %v1535
      %v1611 = vpop.f32.mrf.mxu0
      %v1612 = vadd.f32 %v1496, %v1611
      %1613 = vmatmul.f32.gmra.mxu0 %v1537
      %v1614 = vpop.f32.mrf.mxu0
      %v1615 = vadd.f32 %v1499, %v1614
      %1616 = vdwg.mxu0
      %1617 = vmatpush.msra.mxu0 0.0
      %1618 = vmatpush.msra.mxu0 0.0
      %1619 = vmatpush.msra.mxu0 0.0
      %1620 = vmatpush.msra.mxu0 0.0
      %1621 = vmatpush.msra.mxu0 0.0
      %1622 = vmatpush.msra.mxu0 0.0
      %1623 = vmatpush.msra.mxu0 0.0
      %1624 = vmatpush.msra.mxu0 0.0
      %1625 = vmatpush.msra.mxu0 0.0
      %1626 = vmatpush.msra.mxu0 0.0
      %1627 = vmatpush.msra.mxu0 0.0
      %1628 = vmatpush.msra.mxu0 0.0
      %1629 = vmatpush.msra.mxu0 0.0
      %1630 = vmatpush.msra.mxu0 %v1305
      %1631 = vmatpush.msra.mxu0 %v1113
      %1632 = vmatpush.msra.mxu0 %v1109
      %1633 = vmatmul.f32.gmra.mxu0 %v1533
      %v1634 = vpop.f32.mrf.mxu0
      %v1635 = vadd.f32 %v1519, %v1634
      %1636 = vmatmul.f32.gmra.mxu0 %v1535
      %v1637 = vpop.f32.mrf.mxu0
      %v1638 = vadd.f32 %v1522, %v1637
      %1639 = vmatmul.f32.gmra.mxu0 %v1537
      %v1640 = vpop.f32.mrf.mxu0
      %v1641 = vadd.f32 %v1525, %v1640
      %1642 = vdwg.mxu0
      %1643 = vrot.lane.b32.xlu0 %v1557, 88
      %v1644 = vpop.permute.xlu0 %1643
      %1645 = vrot.lane.b32.xlu0 %v1560, 88
      %v1646 = vpop.permute.xlu0 %1645
      %1647 = vrot.lane.b32.xlu0 %v1563, 88
      %v1648 = vpop.permute.xlu0 %1647
      %1649 = vrot.lane.b32.xlu0 %v1583, 88
      %v1650 = vpop.permute.xlu0 %1649
      %1651 = vrot.lane.b32.xlu0 %v1586, 88
      %v1652 = vpop.permute.xlu0 %1651
      %1653 = vrot.lane.b32.xlu0 %v1589, 88
      %v1654 = vpop.permute.xlu0 %1653
      %1655 = vrot.lane.b32.xlu0 %v1609, 88
      %v1656 = vpop.permute.xlu0 %1655
      %1657 = vrot.lane.b32.xlu0 %v1612, 88
      %v1658 = vpop.permute.xlu0 %1657
      %1659 = vrot.lane.b32.xlu0 %v1615, 88
      %v1660 = vpop.permute.xlu0 %1659
      %1661 = vrot.lane.b32.xlu0 %v1635, 88
      %v1662 = vpop.permute.xlu0 %1661
      %1663 = vrot.lane.b32.xlu0 %v1638, 88
      %v1664 = vpop.permute.xlu0 %1663
      %1665 = vrot.lane.b32.xlu0 %v1641, 88
      %v1666 = vpop.permute.xlu0 %1665
      %vm1667 = vcmp.lt.s32.totalorder %v185, 88
      %v1668 = vsel %vm1667, %v1656, %v1662
      %v1669 = vsel %vm1667, %v1658, %v1664
      %v1670 = vsel %vm1667, %v1660, %v1666
      %v1671 = vsel %vm1667, %v1650, %v1656
      %v1672 = vsel %vm1667, %v1652, %v1658
      %v1673 = vsel %vm1667, %v1654, %v1660
      %v1674 = vsel %vm1667, %v1644, %v1650
      %v1675 = vsel %vm1667, %v1646, %v1652
      %v1676 = vsel %vm1667, %v1648, %v1654
      %v1677 = vsel %vm1667, %v1662, %v1644
      %v1678 = vsel %vm1667, %v1664, %v1646
      %v1679 = vsel %vm1667, %v1666, %v1648
      %v1680 = vadd.f32 %v1325, %v1674
      %v1681 = vadd.f32 %v1351, %v1671
      %v1682 = vadd.f32 %v1377, %v1668
      %v1683 = vadd.f32 %v1403, %v1677
      %v1684 = vadd.f32 %v1328, %v1675
      %v1685 = vadd.f32 %v1354, %v1672
      %v1686 = vadd.f32 %v1380, %v1669
      %v1687 = vadd.f32 %v1406, %v1678
      %v1688 = vadd.f32 %v1331, %v1676
      %v1689 = vadd.f32 %v1357, %v1673
      %v1690 = vadd.f32 %v1383, %v1670
      %v1691 = vadd.f32 %v1409, %v1679
      %1692 = vset.pattern.permute.xlu0 2
      %1693 = vperm.xlu0 %1692, %v321
      %v1694 = vpop.permute.xlu0 %1693
      %1696 = vset.pattern.permute.xlu0 2
      %1697 = vperm.xlu0 %1696, %v322
      %v1698 = vpop.permute.xlu0 %1697
      %1700 = vset.pattern.permute.xlu0 2
      %1701 = vperm.xlu0 %1700, %v323
      %v1702 = vpop.permute.xlu0 %1701
      %v1704 = vadd.f32 %v1680, %v1694
      %v1705 = vadd.f32 %v1681, %v1694
      %v1706 = vadd.f32 %v1682, %v1694
      %v1707 = vadd.f32 %v1683, %v1694
      %v1708 = vadd.f32 %v1684, %v1698
      %v1709 = vadd.f32 %v1685, %v1698
      %v1710 = vadd.f32 %v1686, %v1698
      %v1711 = vadd.f32 %v1687, %v1698
      %v1712 = vadd.f32 %v1688, %v1702
      %v1713 = vadd.f32 %v1689, %v1702
      %v1714 = vadd.f32 %v1690, %v1702
      %v1715 = vadd.f32 %v1691, %v1702
      %v1716 = vmax.f32 %v1704, 0.0
      %v1717 = vmax.f32 %v1705, 0.0
      %v1718 = vmax.f32 %v1706, 0.0
      %v1719 = vmax.f32 %v1707, 0.0
      %v1720 = vmax.f32 %v1708, 0.0
      %v1721 = vmax.f32 %v1709, 0.0
      %v1722 = vmax.f32 %v1710, 0.0
      %v1723 = vmax.f32 %v1711, 0.0
      %v1724 = vmax.f32 %v1712, 0.0
      %v1725 = vmax.f32 %v1713, 0.0
      %v1726 = vmax.f32 %v1714, 0.0
      %v1727 = vmax.f32 %v1715, 0.0
      %1728 = vrot.lane.b32.xlu0 %v1716, 126
      %v1729 = vpop.permute.xlu0 %1728
      %1730 = vrot.lane.b32.xlu0 %v1720, 126
      %v1731 = vpop.permute.xlu0 %1730
      %1732 = vrot.lane.b32.xlu0 %v1724, 126
      %v1733 = vpop.permute.xlu0 %1732
      %1734 = vrot.lane.b32.xlu0 %v1717, 126
      %v1735 = vpop.permute.xlu0 %1734
      %1736 = vrot.lane.b32.xlu0 %v1721, 126
      %v1737 = vpop.permute.xlu0 %1736
      %1738 = vrot.lane.b32.xlu0 %v1725, 126
      %v1739 = vpop.permute.xlu0 %1738
      %1740 = vrot.lane.b32.xlu0 %v1718, 126
      %v1741 = vpop.permute.xlu0 %1740
      %1742 = vrot.lane.b32.xlu0 %v1722, 126
      %v1743 = vpop.permute.xlu0 %1742
      %1744 = vrot.lane.b32.xlu0 %v1726, 126
      %v1745 = vpop.permute.xlu0 %1744
      %1746 = vrot.lane.b32.xlu0 %v1719, 126
      %v1747 = vpop.permute.xlu0 %1746
      %1748 = vrot.lane.b32.xlu0 %v1723, 126
      %v1749 = vpop.permute.xlu0 %1748
      %1750 = vrot.lane.b32.xlu0 %v1727, 126
      %v1751 = vpop.permute.xlu0 %1750
      %v1752 = vsel %vm1142, %v1741, %v1747
      %v1753 = vsel %vm1142, %v1743, %v1749
      %v1754 = vsel %vm1142, %v1745, %v1751
      %v1755 = vsel %vm1142, %v1735, %v1741
      %v1756 = vsel %vm1142, %v1737, %v1743
      %v1757 = vsel %vm1142, %v1739, %v1745
      %v1758 = vsel %vm1142, %v1729, %v1735
      %v1759 = vsel %vm1142, %v1731, %v1737
      %v1760 = vsel %vm1142, %v1733, %v1739
      %v1761 = vsel %vm1142, %v1747, %v1729
      %v1762 = vsel %vm1142, %v1749, %v1731
      %v1763 = vsel %vm1142, %v1751, %v1733
      %v1764 = vld [vmem:[%s1 + $0x48] sm:$0x1]
      %1766 = vrot.lane.b32.xlu0 %v1764, 96
      %v1767 = vpop.permute.xlu0 %1766
      %v1768 = vsel %vm460, %v1767, 0
      %v1771 = vsel %vm467, %v1760, 0
      %v1774 = vsel %vm467, %v1757, 0
      %v1777 = vsel %vm467, %v1754, 0
      %v1780 = vsel %vm467, %v1763, 0
      %1782 = vmatpush.msra.mxu0 0.0
      %1783 = vmatpush.msra.mxu0 0.0
      %1784 = vmatpush.msra.mxu0 0.0
      %1785 = vmatpush.msra.mxu0 0.0
      %1786 = vmatpush.msra.mxu0 0.0
      %1787 = vmatpush.msra.mxu0 0.0
      %1788 = vmatpush.msra.mxu0 0.0
      %1789 = vmatpush.msra.mxu0 0.0
      %1790 = vmatpush.msra.mxu0 0.0
      %1791 = vmatpush.msra.mxu0 0.0
      %1792 = vmatpush.msra.mxu0 0.0
      %1793 = vmatpush.msra.mxu0 0.0
      %1794 = vmatpush.msra.mxu0 0.0
      %1795 = vmatpush.msra.mxu0 %v1771
      %1796 = vmatpush.msra.mxu0 %v1759
      %1797 = vmatpush.msra.mxu0 %v1758
      %1798 = vmatmul.f32.gmra.mxu0 %v1768
      %v1799 = vpop.f32.mrf.mxu0
      %v1800 = vadd.f32 0.0, %v1799
      %1801 = vdwg.mxu0
      %1802 = vmatpush.msra.mxu0 0.0
      %1803 = vmatpush.msra.mxu0 0.0
      %1804 = vmatpush.msra.mxu0 0.0
      %1805 = vmatpush.msra.mxu0 0.0
      %1806 = vmatpush.msra.mxu0 0.0
      %1807 = vmatpush.msra.mxu0 0.0
      %1808 = vmatpush.msra.mxu0 0.0
      %1809 = vmatpush.msra.mxu0 0.0
      %1810 = vmatpush.msra.mxu0 0.0
      %1811 = vmatpush.msra.mxu0 0.0
      %1812 = vmatpush.msra.mxu0 0.0
      %1813 = vmatpush.msra.mxu0 0.0
      %1814 = vmatpush.msra.mxu0 0.0
      %1815 = vmatpush.msra.mxu0 %v1774
      %1816 = vmatpush.msra.mxu0 %v1756
      %1817 = vmatpush.msra.mxu0 %v1755
      %1818 = vmatmul.f32.gmra.mxu0 %v1768
      %v1819 = vpop.f32.mrf.mxu0
      %v1820 = vadd.f32 0.0, %v1819
      %1821 = vdwg.mxu0
      %1822 = vmatpush.msra.mxu0 0.0
      %1823 = vmatpush.msra.mxu0 0.0
      %1824 = vmatpush.msra.mxu0 0.0
      %1825 = vmatpush.msra.mxu0 0.0
      %1826 = vmatpush.msra.mxu0 0.0
      %1827 = vmatpush.msra.mxu0 0.0
      %1828 = vmatpush.msra.mxu0 0.0
      %1829 = vmatpush.msra.mxu0 0.0
      %1830 = vmatpush.msra.mxu0 0.0
      %1831 = vmatpush.msra.mxu0 0.0
      %1832 = vmatpush.msra.mxu0 0.0
      %1833 = vmatpush.msra.mxu0 0.0
      %1834 = vmatpush.msra.mxu0 0.0
      %1835 = vmatpush.msra.mxu0 %v1777
      %1836 = vmatpush.msra.mxu0 %v1753
      %1837 = vmatpush.msra.mxu0 %v1752
      %1838 = vmatmul.f32.gmra.mxu0 %v1768
      %v1839 = vpop.f32.mrf.mxu0
      %v1840 = vadd.f32 0.0, %v1839
      %1841 = vdwg.mxu0
      %1842 = vmatpush.msra.mxu0 0.0
      %1843 = vmatpush.msra.mxu0 0.0
      %1844 = vmatpush.msra.mxu0 0.0
      %1845 = vmatpush.msra.mxu0 0.0
      %1846 = vmatpush.msra.mxu0 0.0
      %1847 = vmatpush.msra.mxu0 0.0
      %1848 = vmatpush.msra.mxu0 0.0
      %1849 = vmatpush.msra.mxu0 0.0
      %1850 = vmatpush.msra.mxu0 0.0
      %1851 = vmatpush.msra.mxu0 0.0
      %1852 = vmatpush.msra.mxu0 0.0
      %1853 = vmatpush.msra.mxu0 0.0
      %1854 = vmatpush.msra.mxu0 0.0
      %1855 = vmatpush.msra.mxu0 %v1780
      %1856 = vmatpush.msra.mxu0 %v1762
      %1857 = vmatpush.msra.mxu0 %v1761
      %1858 = vmatmul.f32.gmra.mxu0 %v1768
      %v1859 = vpop.f32.mrf.mxu0
      %v1860 = vadd.f32 0.0, %v1859
      %1861 = vdwg.mxu0
      %v1862 = vsel %vm460, %v1764, 0
      %v1865 = vsel %vm467, %v1724, 0
      %v1868 = vsel %vm467, %v1725, 0
      %v1871 = vsel %vm467, %v1726, 0
      %v1874 = vsel %vm467, %v1727, 0
      %1876 = vmatpush.msra.mxu0 0.0
      %1877 = vmatpush.msra.mxu0 0.0
      %1878 = vmatpush.msra.mxu0 0.0
      %1879 = vmatpush.msra.mxu0 0.0
      %1880 = vmatpush.msra.mxu0 0.0
      %1881 = vmatpush.msra.mxu0 0.0
      %1882 = vmatpush.msra.mxu0 0.0
      %1883 = vmatpush.msra.mxu0 0.0
      %1884 = vmatpush.msra.mxu0 0.0
      %1885 = vmatpush.msra.mxu0 0.0
      %1886 = vmatpush.msra.mxu0 0.0
      %1887 = vmatpush.msra.mxu0 0.0
      %1888 = vmatpush.msra.mxu0 0.0
      %1889 = vmatpush.msra.mxu0 %v1865
      %1890 = vmatpush.msra.mxu0 %v1720
      %1891 = vmatpush.msra.mxu0 %v1716
      %1892 = vmatmul.f32.gmra.mxu0 %v1862
      %v1893 = vpop.f32.mrf.mxu0
      %v1894 = vadd.f32 %v1800, %v1893
      %1895 = vdwg.mxu0
      %1896 = vmatpush.msra.mxu0 0.0
      %1897 = vmatpush.msra.mxu0 0.0
      %1898 = vmatpush.msra.mxu0 0.0
      %1899 = vmatpush.msra.mxu0 0.0
      %1900 = vmatpush.msra.mxu0 0.0
      %1901 = vmatpush.msra.mxu0 0.0
      %1902 = vmatpush.msra.mxu0 0.0
      %1903 = vmatpush.msra.mxu0 0.0
      %1904 = vmatpush.msra.mxu0 0.0
      %1905 = vmatpush.msra.mxu0 0.0
      %1906 = vmatpush.msra.mxu0 0.0
      %1907 = vmatpush.msra.mxu0 0.0
      %1908 = vmatpush.msra.mxu0 0.0
      %1909 = vmatpush.msra.mxu0 %v1868
      %1910 = vmatpush.msra.mxu0 %v1721
      %1911 = vmatpush.msra.mxu0 %v1717
      %1912 = vmatmul.f32.gmra.mxu0 %v1862
      %v1913 = vpop.f32.mrf.mxu0
      %v1914 = vadd.f32 %v1820, %v1913
      %1915 = vdwg.mxu0
      %1916 = vmatpush.msra.mxu0 0.0
      %1917 = vmatpush.msra.mxu0 0.0
      %1918 = vmatpush.msra.mxu0 0.0
      %1919 = vmatpush.msra.mxu0 0.0
      %1920 = vmatpush.msra.mxu0 0.0
      %1921 = vmatpush.msra.mxu0 0.0
      %1922 = vmatpush.msra.mxu0 0.0
      %1923 = vmatpush.msra.mxu0 0.0
      %1924 = vmatpush.msra.mxu0 0.0
      %1925 = vmatpush.msra.mxu0 0.0
      %1926 = vmatpush.msra.mxu0 0.0
      %1927 = vmatpush.msra.mxu0 0.0
      %1928 = vmatpush.msra.mxu0 0.0
      %1929 = vmatpush.msra.mxu0 %v1871
      %1930 = vmatpush.msra.mxu0 %v1722
      %1931 = vmatpush.msra.mxu0 %v1718
      %1932 = vmatmul.f32.gmra.mxu0 %v1862
      %v1933 = vpop.f32.mrf.mxu0
      %v1934 = vadd.f32 %v1840, %v1933
      %1935 = vdwg.mxu0
      %1936 = vmatpush.msra.mxu0 0.0
      %1937 = vmatpush.msra.mxu0 0.0
      %1938 = vmatpush.msra.mxu0 0.0
      %1939 = vmatpush.msra.mxu0 0.0
      %1940 = vmatpush.msra.mxu0 0.0
      %1941 = vmatpush.msra.mxu0 0.0
      %1942 = vmatpush.msra.mxu0 0.0
      %1943 = vmatpush.msra.mxu0 0.0
      %1944 = vmatpush.msra.mxu0 0.0
      %1945 = vmatpush.msra.mxu0 0.0
      %1946 = vmatpush.msra.mxu0 0.0
      %1947 = vmatpush.msra.mxu0 0.0
      %1948 = vmatpush.msra.mxu0 0.0
      %1949 = vmatpush.msra.mxu0 %v1874
      %1950 = vmatpush.msra.mxu0 %v1723
      %1951 = vmatpush.msra.mxu0 %v1719
      %1952 = vmatmul.f32.gmra.mxu0 %v1862
      %v1953 = vpop.f32.mrf.mxu0
      %v1954 = vadd.f32 %v1860, %v1953
      %1955 = vdwg.mxu0
      %1956 = vrot.lane.b32.xlu0 %v1764, 32
      %v1957 = vpop.permute.xlu0 %1956
      %v1958 = vsel %vm460, %v1957, 0
      %1960 = vmatpush.msra.mxu0 0.0
      %1961 = vmatpush.msra.mxu0 0.0
      %1962 = vmatpush.msra.mxu0 0.0
      %1963 = vmatpush.msra.mxu0 0.0
      %1964 = vmatpush.msra.mxu0 0.0
      %1965 = vmatpush.msra.mxu0 0.0
      %1966 = vmatpush.msra.mxu0 0.0
      %1967 = vmatpush.msra.mxu0 0.0
      %1968 = vmatpush.msra.mxu0 0.0
      %1969 = vmatpush.msra.mxu0 0.0
      %1970 = vmatpush.msra.mxu0 0.0
      %1971 = vmatpush.msra.mxu0 0.0
      %1972 = vmatpush.msra.mxu0 0.0
      %1973 = vmatpush.msra.mxu0 %v1771
      %1974 = vmatpush.msra.mxu0 %v1759
      %1975 = vmatpush.msra.mxu0 %v1758
      %1976 = vmatmul.f32.gmra.mxu0 %v1958
      %v1977 = vpop.f32.mrf.mxu0
      %v1978 = vadd.f32 0.0, %v1977
      %1979 = vdwg.mxu0
      %1980 = vmatpush.msra.mxu0 0.0
      %1981 = vmatpush.msra.mxu0 0.0
      %1982 = vmatpush.msra.mxu0 0.0
      %1983 = vmatpush.msra.mxu0 0.0
      %1984 = vmatpush.msra.mxu0 0.0
      %1985 = vmatpush.msra.mxu0 0.0
      %1986 = vmatpush.msra.mxu0 0.0
      %1987 = vmatpush.msra.mxu0 0.0
      %1988 = vmatpush.msra.mxu0 0.0
      %1989 = vmatpush.msra.mxu0 0.0
      %1990 = vmatpush.msra.mxu0 0.0
      %1991 = vmatpush.msra.mxu0 0.0
      %1992 = vmatpush.msra.mxu0 0.0
      %1993 = vmatpush.msra.mxu0 %v1774
      %1994 = vmatpush.msra.mxu0 %v1756
      %1995 = vmatpush.msra.mxu0 %v1755
      %1996 = vmatmul.f32.gmra.mxu0 %v1958
      %v1997 = vpop.f32.mrf.mxu0
      %v1998 = vadd.f32 0.0, %v1997
      %1999 = vdwg.mxu0
      %2000 = vmatpush.msra.mxu0 0.0
      %2001 = vmatpush.msra.mxu0 0.0
      %2002 = vmatpush.msra.mxu0 0.0
      %2003 = vmatpush.msra.mxu0 0.0
      %2004 = vmatpush.msra.mxu0 0.0
      %2005 = vmatpush.msra.mxu0 0.0
      %2006 = vmatpush.msra.mxu0 0.0
      %2007 = vmatpush.msra.mxu0 0.0
      %2008 = vmatpush.msra.mxu0 0.0
      %2009 = vmatpush.msra.mxu0 0.0
      %2010 = vmatpush.msra.mxu0 0.0
      %2011 = vmatpush.msra.mxu0 0.0
      %2012 = vmatpush.msra.mxu0 0.0
      %2013 = vmatpush.msra.mxu0 %v1777
      %2014 = vmatpush.msra.mxu0 %v1753
      %2015 = vmatpush.msra.mxu0 %v1752
      %2016 = vmatmul.f32.gmra.mxu0 %v1958
      %v2017 = vpop.f32.mrf.mxu0
      %v2018 = vadd.f32 0.0, %v2017
      %2019 = vdwg.mxu0
      %2020 = vmatpush.msra.mxu0 0.0
      %2021 = vmatpush.msra.mxu0 0.0
      %2022 = vmatpush.msra.mxu0 0.0
      %2023 = vmatpush.msra.mxu0 0.0
      %2024 = vmatpush.msra.mxu0 0.0
      %2025 = vmatpush.msra.mxu0 0.0
      %2026 = vmatpush.msra.mxu0 0.0
      %2027 = vmatpush.msra.mxu0 0.0
      %2028 = vmatpush.msra.mxu0 0.0
      %2029 = vmatpush.msra.mxu0 0.0
      %2030 = vmatpush.msra.mxu0 0.0
      %2031 = vmatpush.msra.mxu0 0.0
      %2032 = vmatpush.msra.mxu0 0.0
      %2033 = vmatpush.msra.mxu0 %v1780
      %2034 = vmatpush.msra.mxu0 %v1762
      %2035 = vmatpush.msra.mxu0 %v1761
      %2036 = vmatmul.f32.gmra.mxu0 %v1958
      %v2037 = vpop.f32.mrf.mxu0
      %v2038 = vadd.f32 0.0, %v2037
      %2039 = vdwg.mxu0
      %2040 = vrot.lane.b32.xlu0 %v1764, 64
      %v2041 = vpop.permute.xlu0 %2040
      %v2042 = vsel %vm460, %v2041, 0
      %2044 = vmatpush.msra.mxu0 0.0
      %2045 = vmatpush.msra.mxu0 0.0
      %2046 = vmatpush.msra.mxu0 0.0
      %2047 = vmatpush.msra.mxu0 0.0
      %2048 = vmatpush.msra.mxu0 0.0
      %2049 = vmatpush.msra.mxu0 0.0
      %2050 = vmatpush.msra.mxu0 0.0
      %2051 = vmatpush.msra.mxu0 0.0
      %2052 = vmatpush.msra.mxu0 0.0
      %2053 = vmatpush.msra.mxu0 0.0
      %2054 = vmatpush.msra.mxu0 0.0
      %2055 = vmatpush.msra.mxu0 0.0
      %2056 = vmatpush.msra.mxu0 0.0
      %2057 = vmatpush.msra.mxu0 %v1865
      %2058 = vmatpush.msra.mxu0 %v1720
      %2059 = vmatpush.msra.mxu0 %v1716
      %2060 = vmatmul.f32.gmra.mxu0 %v2042
      %v2061 = vpop.f32.mrf.mxu0
      %v2062 = vadd.f32 %v1978, %v2061
      %2063 = vdwg.mxu0
      %2064 = vmatpush.msra.mxu0 0.0
      %2065 = vmatpush.msra.mxu0 0.0
      %2066 = vmatpush.msra.mxu0 0.0
      %2067 = vmatpush.msra.mxu0 0.0
      %2068 = vmatpush.msra.mxu0 0.0
      %2069 = vmatpush.msra.mxu0 0.0
      %2070 = vmatpush.msra.mxu0 0.0
      %2071 = vmatpush.msra.mxu0 0.0
      %2072 = vmatpush.msra.mxu0 0.0
      %2073 = vmatpush.msra.mxu0 0.0
      %2074 = vmatpush.msra.mxu0 0.0
      %2075 = vmatpush.msra.mxu0 0.0
      %2076 = vmatpush.msra.mxu0 0.0
      %2077 = vmatpush.msra.mxu0 %v1868
      %2078 = vmatpush.msra.mxu0 %v1721
      %2079 = vmatpush.msra.mxu0 %v1717
      %2080 = vmatmul.f32.gmra.mxu0 %v2042
      %v2081 = vpop.f32.mrf.mxu0
      %v2082 = vadd.f32 %v1998, %v2081
      %2083 = vdwg.mxu0
      %2084 = vmatpush.msra.mxu0 0.0
      %2085 = vmatpush.msra.mxu0 0.0
      %2086 = vmatpush.msra.mxu0 0.0
      %2087 = vmatpush.msra.mxu0 0.0
      %2088 = vmatpush.msra.mxu0 0.0
      %2089 = vmatpush.msra.mxu0 0.0
      %2090 = vmatpush.msra.mxu0 0.0
      %2091 = vmatpush.msra.mxu0 0.0
      %2092 = vmatpush.msra.mxu0 0.0
      %2093 = vmatpush.msra.mxu0 0.0
      %2094 = vmatpush.msra.mxu0 0.0
      %2095 = vmatpush.msra.mxu0 0.0
      %2096 = vmatpush.msra.mxu0 0.0
      %2097 = vmatpush.msra.mxu0 %v1871
      %2098 = vmatpush.msra.mxu0 %v1722
      %2099 = vmatpush.msra.mxu0 %v1718
      %2100 = vmatmul.f32.gmra.mxu0 %v2042
      %v2101 = vpop.f32.mrf.mxu0
      %v2102 = vadd.f32 %v2018, %v2101
      %2103 = vdwg.mxu0
      %2104 = vmatpush.msra.mxu0 0.0
      %2105 = vmatpush.msra.mxu0 0.0
      %2106 = vmatpush.msra.mxu0 0.0
      %2107 = vmatpush.msra.mxu0 0.0
      %2108 = vmatpush.msra.mxu0 0.0
      %2109 = vmatpush.msra.mxu0 0.0
      %2110 = vmatpush.msra.mxu0 0.0
      %2111 = vmatpush.msra.mxu0 0.0
      %2112 = vmatpush.msra.mxu0 0.0
      %2113 = vmatpush.msra.mxu0 0.0
      %2114 = vmatpush.msra.mxu0 0.0
      %2115 = vmatpush.msra.mxu0 0.0
      %2116 = vmatpush.msra.mxu0 0.0
      %2117 = vmatpush.msra.mxu0 %v1874
      %2118 = vmatpush.msra.mxu0 %v1723
      %2119 = vmatpush.msra.mxu0 %v1719
      %2120 = vmatmul.f32.gmra.mxu0 %v2042
      %v2121 = vpop.f32.mrf.mxu0
      %v2122 = vadd.f32 %v2038, %v2121
      %2123 = vdwg.mxu0
      %v2124 = vld [vmem:[%s1 + $0x60] sm:$0x1]
      %2125 = vrot.lane.b32.xlu0 %v2062, 88
      %v2126 = vpop.permute.xlu0 %2125
      %2127 = vrot.lane.b32.xlu0 %v2082, 88
      %v2128 = vpop.permute.xlu0 %2127
      %2129 = vrot.lane.b32.xlu0 %v2102, 88
      %v2130 = vpop.permute.xlu0 %2129
      %2131 = vrot.lane.b32.xlu0 %v2122, 88
      %v2132 = vpop.permute.xlu0 %2131
      %v2133 = vsel %vm1667, %v2130, %v2132
      %v2134 = vsel %vm1667, %v2128, %v2130
      %v2135 = vsel %vm1667, %v2126, %v2128
      %v2136 = vsel %vm1667, %v2132, %v2126
      %v2137 = vadd.f32 %v1894, %v2135
      %v2138 = vadd.f32 %v1914, %v2134
      %v2139 = vadd.f32 %v1934, %v2133
      %v2140 = vadd.f32 %v1954, %v2136
      %2142 = vset.pattern.permute.xlu0 3
      %2143 = vperm.xlu0 %2142, %v2124
      %v2144 = vpop.permute.xlu0 %2143
      %v2146 = vadd.f32 %v2137, %v2144
      %v2147 = vadd.f32 %v2138, %v2144
      %v2148 = vadd.f32 %v2139, %v2144
      %v2149 = vadd.f32 %v2140, %v2144
      %v2150 = vmax.f32 %v2146, 0.0
      %v2151 = vmax.f32 %v2147, 0.0
      %v2152 = vmax.f32 %v2148, 0.0
      %v2153 = vmax.f32 %v2149, 0.0
      %2154 = vrot.lane.b32.xlu0 %v2150, 126
      %v2155 = vpop.permute.xlu0 %2154
      %2156 = vrot.lane.b32.xlu0 %v2151, 126
      %v2157 = vpop.permute.xlu0 %2156
      %2158 = vrot.lane.b32.xlu0 %v2152, 126
      %v2159 = vpop.permute.xlu0 %2158
      %2160 = vrot.lane.b32.xlu0 %v2153, 126
      %v2161 = vpop.permute.xlu0 %2160
      %v2162 = vsel %vm1142, %v2159, %v2161
      %v2163 = vsel %vm1142, %v2157, %v2159
      %v2164 = vsel %vm1142, %v2155, %v2157
      %v2165 = vsel %vm1142, %v2161, %v2155
      %v2166 = vmax.f32 %v2150, %v2164
      %v2167 = vmax.f32 %v2151, %v2163
      %v2168 = vmax.f32 %v2152, %v2162
      %v2169 = vmax.f32 %v2153, %v2165
      %2170 = vrot.lane.b32.xlu0 %v2166, 88
      %v2171 = vpop.permute.xlu0 %2170
      %2172 = vrot.lane.b32.xlu0 %v2167, 88
      %v2173 = vpop.permute.xlu0 %2172
      %2174 = vrot.lane.b32.xlu0 %v2168, 88
      %v2175 = vpop.permute.xlu0 %2174
      %2176 = vrot.lane.b32.xlu0 %v2169, 88
      %v2177 = vpop.permute.xlu0 %2176
      %v2178 = vsel %vm1667, %v2175, %v2177
      %v2179 = vsel %vm1667, %v2173, %v2175
      %v2180 = vsel %vm1667, %v2171, %v2173
      %v2181 = vsel %vm1667, %v2177, %v2171
      %v2182 = vmax.f32 %v2166, %v2180
      %v2183 = vmax.f32 %v2167, %v2179
      %v2184 = vmax.f32 %v2168, %v2178
      %v2185 = vmax.f32 %v2169, %v2181
      %v2186 = vmax.f32 %v2182, 0.0
      %v2187 = vmax.f32 %v2183, 0.0
      %v2188 = vmax.f32 %v2184, 0.0
      %v2189 = vmax.f32 %v2185, 0.0
      %v2190 = vld [vmem:[%s2] sm:$0x7]
      %v2191 = vld [vmem:[%s2 + $0x8] sm:$0x7]
      %v2192 = vld [vmem:[%s2 + $0x10] sm:$0x7]
      %v2193 = vld [vmem:[%s2 + $0x18] sm:$0x7]
      %v2194 = vperm.slane %v2186, 0
      %v2195 = vperm.slane %v2187, 0
      %v2196 = vperm.slane %v2188, 0
      %v2197 = vperm.slane %v2189, 0
      %v2198 = vmul.f32 %v2190, %v2194
      %v2199 = vmul.f32 %v2191, %v2195
      %v2200 = vmul.f32 %v2192, %v2196
      %v2201 = vmul.f32 %v2193, %v2197
      %vm2202 = vcmask 1042432
      %v2203 = vsel %vm2202, %v2198, 0.0
      %v2204 = vsel %vm2202, %v2199, 0.0
      %v2205 = vadd.f32 %v2203, %v2204
      %v2206 = vsel %vm2202, %v2200, 0.0
      %v2207 = vadd.f32 %v2205, %v2206
      %v2208 = vsel %vm2202, %v2201, 0.0
      %v2209 = vadd.f32 %v2207, %v2208
      %2210 = vadd.xlane.f32.xlu0 %v2209
      %v2211 = vpop.xlane.xlu0 %2210
      %v2212 = vld [vmem:[%s1 + $0x60] sm:$0x7]
      %v2213 = vadd.f32 %v2211, %v2212
      %2214 = vst [vmem:[%s165] sm:$0xff] 0.0
      %2216 = vrot.lane.b32.xlu0 %v2213, 124
      %v2217 = vpop.permute.xlu0 %2216
      %vm2219 = vcmask 2048
      %2220 = vst.msk [vmem:[%s165] sm:$0x7] %vm2219, %v2217
      %p2221 = scmp.lt.s32.totalorder %s14, 7
      %s2222 = scalar_select %p2221, %s14, 7
      %s2223 = smul.addr %s2222, 8
      %s2224 = scalar_lea.vmem %s3, %s2223
      // Predicated region
      $region33: #{model_cnn_forward_batch.1} parent=31 // pred_check
        %p2225 = pneg %p100
      $region34: #{model_cnn_forward_batch.1} parent=31 // pred_check_branch
        %2227 = sbr.rel (%p2225) target = $region36
      $region35: #{model_cnn_forward_batch.1} parent=31 // pred_region
        _
      $region36: #{model_cnn_forward_batch.1} parent=31 // pred_fallthru
        _
    $region32: #{model_cnn_forward_batch.1} parent=5 // pred_fallthru
      _
    %p2228 = scmp.le.s32.totalorder 2, %s9
    // Predicated region
    $region37: #{model_cnn_forward_batch.1} parent=5 // pred_check
      %p2229 = pneg %p2228
    $region38: #{model_cnn_forward_batch.1} parent=5 // pred_check_branch
      %2231 = sbr.rel (%p2229) target = $region40
    $region39: #{model_cnn_forward_batch.1} parent=5 // pred_region
      %s2232 = ssub.s32 %s9, 2
      // Predicated region
      $region41: #{model_cnn_forward_batch.1} parent=39 // pred_check
        %p2233 = pneg %p106
      $region42: #{model_cnn_forward_batch.1} parent=39 // pred_check_branch
        %2235 = sbr.rel (%p2233) target = $region44
      $region43: #{model_cnn_forward_batch.1} parent=39 // pred_region
        %p2236 = scmp.lt.s32.totalorder %s15, 7
        %s2237 = scalar_select %p2236, %s15, 7
        %s2238 = smul.addr %s2237, 8
        %s2239 = scalar_lea.vmem %s3, %s2238
      $region44: #{model_cnn_forward_batch.1} parent=39 // pred_fallthru
        _
    $region40: #{model_cnn_forward_batch.1} parent=5 // pred_fallthru
      _
  $region6: #{model_cnn_forward_batch.1} parent=0 // loop_footer
    %s13 = sadd.s32 1, %s9
  $region7: #{model_cnn_forward_batch.1} parent=0 // loop_footer_branch
    %8 = sbr.rel target = $region3
  $region8: #{model_cnn_forward_batch.1} parent=0 // loop_exit
    _

</llo_original>
